<compile_context>
chip_gen: v7x
topology: tpu7x:2x2x1
jax: 0.10.0
libtpu: 0.0.40
codegen_flags: <defaults>
</compile_context>

<pallas_src>
import functools

import jax
import jax.numpy as jnp
from jax.experimental import pallas as pl
from jax.experimental.pallas import tpu as pltpu


# ----------------------------------------------------------------------------
# Fused kernel: pool(max/avg) + bn1 + conv1(3x3) + bn2 + sigmoid
#               + conv2(3x3) + bn3 + (avgpool->1x1 conv) residual + sigmoid
# ----------------------------------------------------------------------------
def _down_block_kernel(x_ref, sel_ref, mask_ref, s1_ref, b1_ref, w1_ref,
                       b2_ref, w2_ref, b3_ref, wd_ref, bd_ref, o_ref,
                       taps1_ref, taps2_ref, *, nb, cin, cout, hp, wp):
    l1 = hp * wp                      # pooled pixels per sample (lanes / sample)

    # ---------------- fused 2x2 max/avg pooling (per sample) ----------------
    # sel_ref[k] is an exact 0/1 (H*W, Hp*Wp) gather matrix selecting source
    # pixel (2y+ky, 2x+kx) for every pooled (y, x): f32 matmul == exact gather.
    xm_parts, xa_parts = [], []
    for i in range(nb):
        xs = x_ref[i]                                       # (cin, H*W) lane-dense
        p00 = jnp.dot(xs, sel_ref[0], preferred_element_type=jnp.float32)
        p01 = jnp.dot(xs, sel_ref[1], preferred_element_type=jnp.float32)
        p10 = jnp.dot(xs, sel_ref[2], preferred_element_type=jnp.float32)
        p11 = jnp.dot(xs, sel_ref[3], preferred_element_type=jnp.float32)
        xm = jnp.maximum(jnp.maximum(p00, p01), jnp.maximum(p10, p11))
        xm_parts.append(xm * s1_ref[...] + b1_ref[...])     # bn1 (pre-conv1)
        xa_parts.append((p00 + p01) + (p10 + p11))          # window sum (0.25 in wd)
    xmb = xm_parts[0] if nb == 1 else jnp.concatenate(xm_parts, axis=-1)
    xab = xa_parts[0] if nb == 1 else jnp.concatenate(xa_parts, axis=-1)

    # ---------------- identity path: 1x1 conv on avg-pooled x ---------------
    ident = jnp.dot(wd_ref[...], xab.astype(jnp.bfloat16),
                    preferred_element_type=jnp.float32) + bd_ref[...]

    # tap lane offsets on the flat (y*wp + x) axis, row-major (dy, dx)
    offs = [ry * wp + rx for ry in (-1, 0, 1) for rx in (-1, 0, 1)]

    def build_taps(src, taps_ref, c):
        # 9 statically shifted copies of `src`; out-of-image lanes are zeroed by
        # the precomputed masks (exactly Conv2d's zero padding).  Pieces are
        # stacked on the sublane axis of a VMEM scratch, then loaded contiguously.
        for t, off in enumerate(offs):
            if off == 0:
                tap = src                                   # centre tap, mask == 1
            else:
                tap = jnp.roll(src, -off, axis=-1) * mask_ref[t:t + 1, :]
            taps_ref[t * c:(t + 1) * c, :] = tap
        return taps_ref[...]

    # ---------------- conv1 (3x3) as ONE GEMM, K = 9*cin --------------------
    taps1 = build_taps(xmb, taps1_ref, cin)
    h = jnp.dot(w1_ref[...], taps1.astype(jnp.bfloat16),
                preferred_element_type=jnp.float32)
    h = 0.5 * jnp.tanh(h + b2_ref[...]) + 0.5               # sigmoid (0.5 folded in w1/b2)

    # ---------------- conv2 (3x3) as ONE GEMM, K = 9*cout -------------------
    taps2 = build_taps(h, taps2_ref, cout)
    out = jnp.dot(w2_ref[...], taps2.astype(jnp.bfloat16),
                  preferred_element_type=jnp.float32)
    out = 0.5 * jnp.tanh(out + b3_ref[...] + ident) + 0.5   # final sigmoid

    # lane-dense stores, already NCHW-flat (channels on sublanes, HW on lanes)
    for i in range(nb):
        o_ref[i] = out[:, i * l1:(i + 1) * l1]


# ----------------------------------------------------------------------------
# Wrapper: trace-time table/weight folding + single pallas_call
# ----------------------------------------------------------------------------
def _pick_samples_per_step(n, l1):
    """Samples packed per grid step: keep >=2 parallel grid steps (v7x has two
    TensorCores), then grow the GEMM/store lane width nb*l1 toward >= 256."""
    nb = 1
    for cand in range(1, n + 1):
        if n % cand:
            continue
        if n >= 2 and n // cand < 2:
            break
        nb = cand
        if cand * l1 >= 256:
            break
    return nb


def downsampling_block(x_nchw, p):
    """Fused DownsamplingBlock forward: (N, Cin, H, W) -> (N, Cout, H//2, W//2)."""
    N, Cin, H, W = x_nchw.shape
    Cout = p['w1'].shape[-1]
    Hp, Wp = H // 2, W // 2                       # floor, matches torch pooling
    HW, L1 = H * W, Hp * Wp

    nb = _pick_samples_per_step(N, L1)
    nl = nb * L1

    # Channels-first throughout; flattening HW onto the minor axis is free.
    x_flat = x_nchw.reshape(N, Cin, HW).astype(jnp.float32)

    # ---- trace-time constant tables (pooling gathers + conv boundary masks) ----
    dst = jnp.arange(L1)
    yp, xp = dst // Wp, dst % Wp
    rows = jnp.arange(HW)[:, None]
    sel = jnp.stack(
        [(rows == ((2 * yp + ky) * W + (2 * xp + kx))[None, :]).astype(jnp.float32)
         for ky in (0, 1) for kx in (0, 1)], axis=0)                   # (4, HW, L1)
    tap_mask = jnp.stack(
        [((yp + ry >= 0) & (yp + ry < Hp) & (xp + rx >= 0) & (xp + rx < Wp))
         .astype(jnp.float32)
         for ry in (-1, 0, 1) for rx in (-1, 0, 1)], axis=0)           # (9, L1)
    tap_mask = jnp.tile(tap_mask, (1, nb))                             # (9, nb*L1)

    # ---- trace-time folding: bn scales, sigmoid inner 0.5, avg-pool 0.25 ----
    w1f = jnp.transpose(p['w1'] * (0.5 * p['bn2_s'])[None, None, None, :],
                        (3, 0, 1, 2)).reshape(Cout, 9 * Cin).astype(jnp.bfloat16)
    w2f = jnp.transpose(p['w2'] * (0.5 * p['bn3_s'])[None, None, None, :],
                        (3, 0, 1, 2)).reshape(Cout, 9 * Cout).astype(jnp.bfloat16)
    wdf = (0.125 * p['wd'].reshape(Cin, Cout).T).astype(jnp.bfloat16)  # 0.25 avg * 0.5
    s1 = p['bn1_s'].reshape(Cin, 1).astype(jnp.float32)
    b1 = p['bn1_sh'].reshape(Cin, 1).astype(jnp.float32)
    b2 = (0.5 * p['bn2_sh']).reshape(Cout, 1).astype(jnp.float32)
    b3 = (0.5 * p['bn3_sh']).reshape(Cout, 1).astype(jnp.float32)
    bd = (0.5 * p['bd']).reshape(Cout, 1).astype(jnp.float32)

    kernel = functools.partial(_down_block_kernel,
                               nb=nb, cin=Cin, cout=Cout, hp=Hp, wp=Wp)
    out = pl.pallas_call(
        kernel,
        out_shape=jax.ShapeDtypeStruct((N, Cout, L1), jnp.float32),
        grid=(N // nb,),
        in_specs=[
            pl.BlockSpec((nb, Cin, HW), lambda n: (n, 0, 0)),     # x (NCHW-flat)
            pl.BlockSpec((4, HW, L1), lambda n: (0, 0, 0)),       # pooling gather tables
            pl.BlockSpec((9, nl), lambda n: (0, 0)),              # conv-tap boundary masks
            pl.BlockSpec((Cin, 1), lambda n: (0, 0)),             # bn1 scale
            pl.BlockSpec((Cin, 1), lambda n: (0, 0)),             # bn1 shift
            pl.BlockSpec((Cout, 9 * Cin), lambda n: (0, 0)),      # w1 (bn2 scale + 0.5 folded)
            pl.BlockSpec((Cout, 1), lambda n: (0, 0)),            # bn2 shift * 0.5
            pl.BlockSpec((Cout, 9 * Cout), lambda n: (0, 0)),     # w2 (bn3 scale + 0.5 folded)
            pl.BlockSpec((Cout, 1), lambda n: (0, 0)),            # bn3 shift * 0.5
            pl.BlockSpec((Cout, Cin), lambda n: (0, 0)),          # 1x1 identity weight
            pl.BlockSpec((Cout, 1), lambda n: (0, 0)),            # identity bias * 0.5
        ],
        out_specs=pl.BlockSpec((nb, Cout, L1), lambda n: (n, 0, 0)),
        scratch_shapes=[pltpu.VMEM((9 * Cin, nl), jnp.float32),   # conv1 taps
                        pltpu.VMEM((9 * Cout, nl), jnp.float32)], # conv2 taps
        compiler_params=pltpu.CompilerParams(
            dimension_semantics=("parallel",),                    # batch axis -> both TCs
            vmem_limit_bytes=32 * 1024 * 1024),
    )(x_flat, sel, tap_mask, s1, b1, w1f, b2, w2f, b3, wdf, bd)

    return out.reshape(N, Cout, Hp, Wp)            # already NCHW


# ----------------------------------------------------------------------------
# Pure-JAX reference (exact PyTorch forward semantics, f32, HIGHEST precision)
# ----------------------------------------------------------------------------
def downsampling_block_ref(x_nchw, p):
    x = jnp.transpose(x_nchw, (0, 2, 3, 1)).astype(jnp.float32)
    N, H, W, Cin = x.shape
    Hp, Wp = H // 2, W // 2
    xr = x.reshape(N, Hp, 2, Wp, 2, Cin)
    xm = jnp.max(xr, axis=(2, 4))
    xa = jnp.mean(xr, axis=(2, 4))

    def conv(t, w):
        return jax.lax.conv_general_dilated(
            t, w, (1, 1), 'SAME',
            dimension_numbers=('NHWC', 'HWIO', 'NHWC'),
            precision=jax.lax.Precision.HIGHEST)

    identity = conv(xa, p['wd']) + p['bd'][None, None, None, :]
    t = xm * p['bn1_s'] + p['bn1_sh']
    out = conv(t, p['w1']) * p['bn2_s'] + p['bn2_sh']
    out = jax.nn.sigmoid(out)
    out = conv(out, p['w2']) * p['bn3_s'] + p['bn3_sh']
    out = out + identity
    out = jax.nn.sigmoid(out)
    return jnp.transpose(out, (0, 3, 1, 2))


# ----------------------------------------------------------------------------
# Deterministic synthetic parameters (eval-mode BatchNorm folded to scale/shift)
# ----------------------------------------------------------------------------
def init_params(key, in_planes, out_planes):
    keys = iter(jax.random.split(key, 32))

    def nk():
        return next(keys)

    def conv_w(cin, cout, k):
        fan = cin * k * k
        return (jax.random.normal(nk(), (k, k, cin, cout), jnp.float32)
                / jnp.sqrt(jnp.float32(fan)))

    def bn(c):
        gamma = 1.0 + 0.1 * jax.random.normal(nk(), (c,), jnp.float32)
        beta = 0.1 * jax.random.normal(nk(), (c,), jnp.float32)
        mean = 0.1 * jax.random.normal(nk(), (c,), jnp.float32)
        var = 0.9 + 0.2 * jax.random.uniform(nk(), (c,), jnp.float32)
        s = gamma / jnp.sqrt(var + 1e-5)
        return s, beta - mean * s

    s1, sh1 = bn(in_planes)
    s2, sh2 = bn(out_planes)
    s3, sh3 = bn(out_planes)
    return dict(
        bn1_s=s1, bn1_sh=sh1,
        w1=conv_w(in_planes, out_planes, 3), bn2_s=s2, bn2_sh=sh2,
        w2=conv_w(out_planes, out_planes, 3), bn3_s=s3, bn3_sh=sh3,
        wd=conv_w(in_planes, out_planes, 1),
        bd=0.1 * jax.random.normal(nk(), (out_planes,), jnp.float32),
    )


# ----------------------------------------------------------------------------
if __name__ == "__main__":
    root = jax.random.PRNGKey(0)
    k_params, k_input = jax.random.split(root)

    params = init_params(k_params, in_planes=4, out_planes=8)
    x = jax.random.normal(k_input, (2, 4, 16, 16), jnp.float32)    # NCHW input

    fwd = jax.jit(downsampling_block)
    ref_fn = jax.jit(downsampling_block_ref)

    out = jax.block_until_ready(fwd(x, params))
    ref = jax.block_until_ready(ref_fn(x, params))

    assert out.shape == (2, 8, 8, 8), out.shape
    assert out.dtype == jnp.float32
    # bf16 MXU operands (convs + identity 1x1) -> ~1e-2 absolute budget on a
    # sigmoid output in (0, 1); pooling/compaction matmuls are exact f32 gathers.
    max_err = float(jnp.max(jnp.abs(out - ref)))
    assert max_err < 1e-2, f"mismatch vs reference: {max_err}"
    print("KERNEL_OK")
</pallas_src>

<mosaic_0001>
module attributes {stable_mosaic.version = 11 : i64} {
  func.func @_down_block_kernel(%arg0: i32, %arg1: memref<1x4x256xf32, #tpu.memory_space<vmem>>, %arg2: memref<4x256x64xf32, #tpu.memory_space<vmem>>, %arg3: memref<9x64xf32, #tpu.memory_space<vmem>>, %arg4: memref<4x1xf32, #tpu.memory_space<vmem>>, %arg5: memref<4x1xf32, #tpu.memory_space<vmem>>, %arg6: memref<8x36xbf16, #tpu.memory_space<vmem>>, %arg7: memref<8x1xf32, #tpu.memory_space<vmem>>, %arg8: memref<8x72xbf16, #tpu.memory_space<vmem>>, %arg9: memref<8x1xf32, #tpu.memory_space<vmem>>, %arg10: memref<8x4xbf16, #tpu.memory_space<vmem>>, %arg11: memref<8x1xf32, #tpu.memory_space<vmem>>, %arg12: memref<1x8x64xf32, #tpu.memory_space<vmem>>, %arg13: memref<36x64xf32, #tpu.memory_space<vmem>>, %arg14: memref<72x64xf32, #tpu.memory_space<vmem>>) attributes {dimension_semantics = [#tpu.dimension_semantics<parallel>], iteration_bounds = array<i64: 2>, scalar_prefetch = 0 : i64, scratch_operands = 2 : i64, tpu.core_type = #tpu.core_type<tc>, window_params = [{transform_indices = @transform_0, window_bounds = array<i64: 1, 4, 256>}, {pipeline_mode = #tpu.pipeline_mode<synchronous>, transform_indices = @transform_1, window_bounds = array<i64: 4, 256, 64>}, {pipeline_mode = #tpu.pipeline_mode<synchronous>, transform_indices = @transform_2, window_bounds = array<i64: 9, 64>}, {pipeline_mode = #tpu.pipeline_mode<synchronous>, transform_indices = @transform_3, window_bounds = array<i64: 4, 1>}, {pipeline_mode = #tpu.pipeline_mode<synchronous>, transform_indices = @transform_4, window_bounds = array<i64: 4, 1>}, {pipeline_mode = #tpu.pipeline_mode<synchronous>, transform_indices = @transform_5, window_bounds = array<i64: 8, 36>}, {pipeline_mode = #tpu.pipeline_mode<synchronous>, transform_indices = @transform_6, window_bounds = array<i64: 8, 1>}, {pipeline_mode = #tpu.pipeline_mode<synchronous>, transform_indices = @transform_7, window_bounds = array<i64: 8, 72>}, {pipeline_mode = #tpu.pipeline_mode<synchronous>, transform_indices = @transform_8, window_bounds = array<i64: 8, 1>}, {pipeline_mode = #tpu.pipeline_mode<synchronous>, transform_indices = @transform_9, window_bounds = array<i64: 8, 4>}, {pipeline_mode = #tpu.pipeline_mode<synchronous>, transform_indices = @transform_10, window_bounds = array<i64: 8, 1>}, {transform_indices = @transform_11, window_bounds = array<i64: 1, 8, 64>}]} {
    %c0 = arith.constant 0 : index
    %c0_0 = arith.constant 0 : index
    %c0_1 = arith.constant 0 : index
    %0 = vector.load %arg1[%c0, %c0_0, %c0_1] : memref<1x4x256xf32, #tpu.memory_space<vmem>>, vector<1x4x256xf32>
    %1 = vector.shape_cast %0 : vector<1x4x256xf32> to vector<4x256xf32>
    %c0_2 = arith.constant 0 : index
    %c0_3 = arith.constant 0 : index
    %c0_4 = arith.constant 0 : index
    %2 = vector.load %arg2[%c0_2, %c0_3, %c0_4] : memref<4x256x64xf32, #tpu.memory_space<vmem>>, vector<1x256x64xf32>
    %3 = vector.shape_cast %2 : vector<1x256x64xf32> to vector<256x64xf32>
    %cst = arith.constant dense<0.000000e+00> : vector<4x64xf32>
    %4 = tpu.matmul %1, %3, %cst {dimension_numbers = #tpu.dot_dimension_numbers<[1], [0], [0], [1], [0, 0, 1, 1], [], []>} : vector<4x256xf32>, vector<256x64xf32>, vector<4x64xf32> -> vector<4x64xf32>
    %c1 = arith.constant 1 : index
    %c0_5 = arith.constant 0 : index
    %c0_6 = arith.constant 0 : index
    %5 = vector.load %arg2[%c1, %c0_5, %c0_6] : memref<4x256x64xf32, #tpu.memory_space<vmem>>, vector<1x256x64xf32>
    %6 = vector.shape_cast %5 : vector<1x256x64xf32> to vector<256x64xf32>
    %cst_7 = arith.constant dense<0.000000e+00> : vector<4x64xf32>
    %7 = tpu.matmul %1, %6, %cst_7 {dimension_numbers = #tpu.dot_dimension_numbers<[1], [0], [0], [1], [0, 0, 1, 1], [], []>} : vector<4x256xf32>, vector<256x64xf32>, vector<4x64xf32> -> vector<4x64xf32>
    %c2 = arith.constant 2 : index
    %c0_8 = arith.constant 0 : index
    %c0_9 = arith.constant 0 : index
    %8 = vector.load %arg2[%c2, %c0_8, %c0_9] : memref<4x256x64xf32, #tpu.memory_space<vmem>>, vector<1x256x64xf32>
    %9 = vector.shape_cast %8 : vector<1x256x64xf32> to vector<256x64xf32>
    %cst_10 = arith.constant dense<0.000000e+00> : vector<4x64xf32>
    %10 = tpu.matmul %1, %9, %cst_10 {dimension_numbers = #tpu.dot_dimension_numbers<[1], [0], [0], [1], [0, 0, 1, 1], [], []>} : vector<4x256xf32>, vector<256x64xf32>, vector<4x64xf32> -> vector<4x64xf32>
    %c3 = arith.constant 3 : index
    %c0_11 = arith.constant 0 : index
    %c0_12 = arith.constant 0 : index
    %11 = vector.load %arg2[%c3, %c0_11, %c0_12] : memref<4x256x64xf32, #tpu.memory_space<vmem>>, vector<1x256x64xf32>
    %12 = vector.shape_cast %11 : vector<1x256x64xf32> to vector<256x64xf32>
    %cst_13 = arith.constant dense<0.000000e+00> : vector<4x64xf32>
    %13 = tpu.matmul %1, %12, %cst_13 {dimension_numbers = #tpu.dot_dimension_numbers<[1], [0], [0], [1], [0, 0, 1, 1], [], []>} : vector<4x256xf32>, vector<256x64xf32>, vector<4x64xf32> -> vector<4x64xf32>
    %14 = arith.maximumf %4, %7 : vector<4x64xf32>
    %15 = arith.maximumf %10, %13 : vector<4x64xf32>
    %16 = arith.maximumf %14, %15 : vector<4x64xf32>
    %c0_14 = arith.constant 0 : index
    %c0_15 = arith.constant 0 : index
    %17 = vector.load %arg4[%c0_14, %c0_15] : memref<4x1xf32, #tpu.memory_space<vmem>>, vector<4x1xf32>
    %18 = vector.broadcast %17 : vector<4x1xf32> to vector<4x64xf32>
    %19 = arith.mulf %16, %18 : vector<4x64xf32>
    %c0_16 = arith.constant 0 : index
    %c0_17 = arith.constant 0 : index
    %20 = vector.load %arg5[%c0_16, %c0_17] : memref<4x1xf32, #tpu.memory_space<vmem>>, vector<4x1xf32>
    %21 = vector.broadcast %20 : vector<4x1xf32> to vector<4x64xf32>
    %22 = arith.addf %19, %21 : vector<4x64xf32>
    %23 = arith.addf %4, %7 : vector<4x64xf32>
    %24 = arith.addf %10, %13 : vector<4x64xf32>
    %25 = arith.addf %23, %24 : vector<4x64xf32>
    %c0_18 = arith.constant 0 : index
    %c0_19 = arith.constant 0 : index
    %26 = vector.load %arg10[%c0_18, %c0_19] : memref<8x4xbf16, #tpu.memory_space<vmem>>, vector<8x4xbf16>
    %27 = arith.truncf %25 : vector<4x64xf32> to vector<4x64xbf16>
    %cst_20 = arith.constant dense<0.000000e+00> : vector<8x64xf32>
    %28 = tpu.matmul %26, %27, %cst_20 {dimension_numbers = #tpu.dot_dimension_numbers<[1], [0], [0], [1], [0, 0, 1, 1], [], []>} : vector<8x4xbf16>, vector<4x64xbf16>, vector<8x64xf32> -> vector<8x64xf32>
    %c0_21 = arith.constant 0 : index
    %c0_22 = arith.constant 0 : index
    %29 = vector.load %arg11[%c0_21, %c0_22] : memref<8x1xf32, #tpu.memory_space<vmem>>, vector<8x1xf32>
    %30 = vector.broadcast %29 : vector<8x1xf32> to vector<8x64xf32>
    %31 = arith.addf %28, %30 : vector<8x64xf32>
    %32 = vector.extract_strided_slice %22 {offsets = [0, 55], sizes = [4, 9], strides = [1, 1]} : vector<4x64xf32> to vector<4x9xf32>
    %33 = vector.extract_strided_slice %22 {offsets = [0, 0], sizes = [4, 55], strides = [1, 1]} : vector<4x64xf32> to vector<4x55xf32>
    %34 = tpu.concatenate %32, %33 in 1 : vector<4x9xf32>, vector<4x55xf32> -> vector<4x64xf32>
    %c0_23 = arith.constant 0 : index
    %c0_24 = arith.constant 0 : index
    %35 = vector.load %arg3[%c0_23, %c0_24] : memref<9x64xf32, #tpu.memory_space<vmem>>, vector<1x64xf32>
    %36 = vector.broadcast %35 : vector<1x64xf32> to vector<4x64xf32>
    %37 = arith.mulf %34, %36 : vector<4x64xf32>
    %c0_25 = arith.constant 0 : index
    %c0_26 = arith.constant 0 : index
    %38 = vector.load %arg13[%c0_25, %c0_26] : memref<36x64xf32, #tpu.memory_space<vmem>>, vector<4x64xf32>
    tpu.vector_store %arg13[%c0_25, %c0_26], %37 {strides = array<i32>} : memref<36x64xf32, #tpu.memory_space<vmem>>, vector<4x64xf32>,
    %39 = vector.extract_strided_slice %22 {offsets = [0, 56], sizes = [4, 8], strides = [1, 1]} : vector<4x64xf32> to vector<4x8xf32>
    %40 = vector.extract_strided_slice %22 {offsets = [0, 0], sizes = [4, 56], strides = [1, 1]} : vector<4x64xf32> to vector<4x56xf32>
    %41 = tpu.concatenate %39, %40 in 1 : vector<4x8xf32>, vector<4x56xf32> -> vector<4x64xf32>
    %c1_27 = arith.constant 1 : index
    %c0_28 = arith.constant 0 : index
    %42 = vector.load %arg3[%c1_27, %c0_28] : memref<9x64xf32, #tpu.memory_space<vmem>>, vector<1x64xf32>
    %43 = vector.broadcast %42 : vector<1x64xf32> to vector<4x64xf32>
    %44 = arith.mulf %41, %43 : vector<4x64xf32>
    %c4 = arith.constant 4 : index
    %c0_29 = arith.constant 0 : index
    %45 = vector.load %arg13[%c4, %c0_29] : memref<36x64xf32, #tpu.memory_space<vmem>>, vector<4x64xf32>
    tpu.vector_store %arg13[%c4, %c0_29], %44 {strides = array<i32>} : memref<36x64xf32, #tpu.memory_space<vmem>>, vector<4x64xf32>,
    %46 = vector.extract_strided_slice %22 {offsets = [0, 57], sizes = [4, 7], strides = [1, 1]} : vector<4x64xf32> to vector<4x7xf32>
    %47 = vector.extract_strided_slice %22 {offsets = [0, 0], sizes = [4, 57], strides = [1, 1]} : vector<4x64xf32> to vector<4x57xf32>
    %48 = tpu.concatenate %46, %47 in 1 : vector<4x7xf32>, vector<4x57xf32> -> vector<4x64xf32>
    %c2_30 = arith.constant 2 : index
    %c0_31 = arith.constant 0 : index
    %49 = vector.load %arg3[%c2_30, %c0_31] : memref<9x64xf32, #tpu.memory_space<vmem>>, vector<1x64xf32>
    %50 = vector.broadcast %49 : vector<1x64xf32> to vector<4x64xf32>
    %51 = arith.mulf %48, %50 : vector<4x64xf32>
    %c8 = arith.constant 8 : index
    %c0_32 = arith.constant 0 : index
    %52 = vector.load %arg13[%c8, %c0_32] : memref<36x64xf32, #tpu.memory_space<vmem>>, vector<4x64xf32>
    tpu.vector_store %arg13[%c8, %c0_32], %51 {strides = array<i32>} : memref<36x64xf32, #tpu.memory_space<vmem>>, vector<4x64xf32>,
    %53 = vector.extract_strided_slice %22 {offsets = [0, 63], sizes = [4, 1], strides = [1, 1]} : vector<4x64xf32> to vector<4x1xf32>
    %54 = vector.extract_strided_slice %22 {offsets = [0, 0], sizes = [4, 63], strides = [1, 1]} : vector<4x64xf32> to vector<4x63xf32>
    %55 = tpu.concatenate %53, %54 in 1 : vector<4x1xf32>, vector<4x63xf32> -> vector<4x64xf32>
    %c3_33 = arith.constant 3 : index
    %c0_34 = arith.constant 0 : index
    %56 = vector.load %arg3[%c3_33, %c0_34] : memref<9x64xf32, #tpu.memory_space<vmem>>, vector<1x64xf32>
    %57 = vector.broadcast %56 : vector<1x64xf32> to vector<4x64xf32>
    %58 = arith.mulf %55, %57 : vector<4x64xf32>
    %c12 = arith.constant 12 : index
    %c0_35 = arith.constant 0 : index
    %59 = vector.load %arg13[%c12, %c0_35] : memref<36x64xf32, #tpu.memory_space<vmem>>, vector<4x64xf32>
    tpu.vector_store %arg13[%c12, %c0_35], %58 {strides = array<i32>} : memref<36x64xf32, #tpu.memory_space<vmem>>, vector<4x64xf32>,
    %c16 = arith.constant 16 : index
    %c0_36 = arith.constant 0 : index
    %60 = vector.load %arg13[%c16, %c0_36] : memref<36x64xf32, #tpu.memory_space<vmem>>, vector<4x64xf32>
    tpu.vector_store %arg13[%c16, %c0_36], %22 {strides = array<i32>} : memref<36x64xf32, #tpu.memory_space<vmem>>, vector<4x64xf32>,
    %61 = vector.extract_strided_slice %22 {offsets = [0, 1], sizes = [4, 63], strides = [1, 1]} : vector<4x64xf32> to vector<4x63xf32>
    %62 = vector.extract_strided_slice %22 {offsets = [0, 0], sizes = [4, 1], strides = [1, 1]} : vector<4x64xf32> to vector<4x1xf32>
    %63 = tpu.concatenate %61, %62 in 1 : vector<4x63xf32>, vector<4x1xf32> -> vector<4x64xf32>
    %c5 = arith.constant 5 : index
    %c0_37 = arith.constant 0 : index
    %64 = vector.load %arg3[%c5, %c0_37] : memref<9x64xf32, #tpu.memory_space<vmem>>, vector<1x64xf32>
    %65 = vector.broadcast %64 : vector<1x64xf32> to vector<4x64xf32>
    %66 = arith.mulf %63, %65 : vector<4x64xf32>
    %c20 = arith.constant 20 : index
    %c0_38 = arith.constant 0 : index
    %67 = vector.load %arg13[%c20, %c0_38] : memref<36x64xf32, #tpu.memory_space<vmem>>, vector<4x64xf32>
    tpu.vector_store %arg13[%c20, %c0_38], %66 {strides = array<i32>} : memref<36x64xf32, #tpu.memory_space<vmem>>, vector<4x64xf32>,
    %68 = vector.extract_strided_slice %22 {offsets = [0, 7], sizes = [4, 57], strides = [1, 1]} : vector<4x64xf32> to vector<4x57xf32>
    %69 = vector.extract_strided_slice %22 {offsets = [0, 0], sizes = [4, 7], strides = [1, 1]} : vector<4x64xf32> to vector<4x7xf32>
    %70 = tpu.concatenate %68, %69 in 1 : vector<4x57xf32>, vector<4x7xf32> -> vector<4x64xf32>
    %c6 = arith.constant 6 : index
    %c0_39 = arith.constant 0 : index
    %71 = vector.load %arg3[%c6, %c0_39] : memref<9x64xf32, #tpu.memory_space<vmem>>, vector<1x64xf32>
    %72 = vector.broadcast %71 : vector<1x64xf32> to vector<4x64xf32>
    %73 = arith.mulf %70, %72 : vector<4x64xf32>
    %c24 = arith.constant 24 : index
    %c0_40 = arith.constant 0 : index
    %74 = vector.load %arg13[%c24, %c0_40] : memref<36x64xf32, #tpu.memory_space<vmem>>, vector<4x64xf32>
    tpu.vector_store %arg13[%c24, %c0_40], %73 {strides = array<i32>} : memref<36x64xf32, #tpu.memory_space<vmem>>, vector<4x64xf32>,
    %75 = vector.extract_strided_slice %22 {offsets = [0, 8], sizes = [4, 56], strides = [1, 1]} : vector<4x64xf32> to vector<4x56xf32>
    %76 = vector.extract_strided_slice %22 {offsets = [0, 0], sizes = [4, 8], strides = [1, 1]} : vector<4x64xf32> to vector<4x8xf32>
    %77 = tpu.concatenate %75, %76 in 1 : vector<4x56xf32>, vector<4x8xf32> -> vector<4x64xf32>
    %c7 = arith.constant 7 : index
    %c0_41 = arith.constant 0 : index
    %78 = vector.load %arg3[%c7, %c0_41] : memref<9x64xf32, #tpu.memory_space<vmem>>, vector<1x64xf32>
    %79 = vector.broadcast %78 : vector<1x64xf32> to vector<4x64xf32>
    %80 = arith.mulf %77, %79 : vector<4x64xf32>
    %c28 = arith.constant 28 : index
    %c0_42 = arith.constant 0 : index
    %81 = vector.load %arg13[%c28, %c0_42] : memref<36x64xf32, #tpu.memory_space<vmem>>, vector<4x64xf32>
    tpu.vector_store %arg13[%c28, %c0_42], %80 {strides = array<i32>} : memref<36x64xf32, #tpu.memory_space<vmem>>, vector<4x64xf32>,
    %82 = vector.extract_strided_slice %22 {offsets = [0, 9], sizes = [4, 55], strides = [1, 1]} : vector<4x64xf32> to vector<4x55xf32>
    %83 = vector.extract_strided_slice %22 {offsets = [0, 0], sizes = [4, 9], strides = [1, 1]} : vector<4x64xf32> to vector<4x9xf32>
    %84 = tpu.concatenate %82, %83 in 1 : vector<4x55xf32>, vector<4x9xf32> -> vector<4x64xf32>
    %c8_43 = arith.constant 8 : index
    %c0_44 = arith.constant 0 : index
    %85 = vector.load %arg3[%c8_43, %c0_44] : memref<9x64xf32, #tpu.memory_space<vmem>>, vector<1x64xf32>
    %86 = vector.broadcast %85 : vector<1x64xf32> to vector<4x64xf32>
    %87 = arith.mulf %84, %86 : vector<4x64xf32>
    %c32 = arith.constant 32 : index
    %c0_45 = arith.constant 0 : index
    %88 = vector.load %arg13[%c32, %c0_45] : memref<36x64xf32, #tpu.memory_space<vmem>>, vector<4x64xf32>
    tpu.vector_store %arg13[%c32, %c0_45], %87 {strides = array<i32>} : memref<36x64xf32, #tpu.memory_space<vmem>>, vector<4x64xf32>,
    %c0_46 = arith.constant 0 : index
    %c0_47 = arith.constant 0 : index
    %89 = vector.load %arg13[%c0_46, %c0_47] : memref<36x64xf32, #tpu.memory_space<vmem>>, vector<36x64xf32>
    %c0_48 = arith.constant 0 : index
    %c0_49 = arith.constant 0 : index
    %90 = vector.load %arg6[%c0_48, %c0_49] : memref<8x36xbf16, #tpu.memory_space<vmem>>, vector<8x36xbf16>
    %91 = arith.truncf %89 : vector<36x64xf32> to vector<36x64xbf16>
    %cst_50 = arith.constant dense<0.000000e+00> : vector<8x64xf32>
    %92 = tpu.matmul %90, %91, %cst_50 {dimension_numbers = #tpu.dot_dimension_numbers<[1], [0], [0], [1], [0, 0, 1, 1], [], []>} : vector<8x36xbf16>, vector<36x64xbf16>, vector<8x64xf32> -> vector<8x64xf32>
    %c0_51 = arith.constant 0 : index
    %c0_52 = arith.constant 0 : index
    %93 = vector.load %arg7[%c0_51, %c0_52] : memref<8x1xf32, #tpu.memory_space<vmem>>, vector<8x1xf32>
    %94 = vector.broadcast %93 : vector<8x1xf32> to vector<8x64xf32>
    %95 = arith.addf %92, %94 : vector<8x64xf32>
    %96 = math.tanh %95 : vector<8x64xf32>
    %cst_53 = arith.constant 5.000000e-01 : f32
    %97 = vector.broadcast %cst_53 : f32 to vector<8x64xf32>
    %98 = arith.mulf %97, %96 : vector<8x64xf32>
    %cst_54 = arith.constant 5.000000e-01 : f32
    %99 = vector.broadcast %cst_54 : f32 to vector<8x64xf32>
    %100 = arith.addf %98, %99 : vector<8x64xf32>
    %101 = vector.extract_strided_slice %100 {offsets = [0, 55], sizes = [8, 9], strides = [1, 1]} : vector<8x64xf32> to vector<8x9xf32>
    %102 = vector.extract_strided_slice %100 {offsets = [0, 0], sizes = [8, 55], strides = [1, 1]} : vector<8x64xf32> to vector<8x55xf32>
    %103 = tpu.concatenate %101, %102 in 1 : vector<8x9xf32>, vector<8x55xf32> -> vector<8x64xf32>
    %c0_55 = arith.constant 0 : index
    %c0_56 = arith.constant 0 : index
    %104 = vector.load %arg3[%c0_55, %c0_56] : memref<9x64xf32, #tpu.memory_space<vmem>>, vector<1x64xf32>
    %105 = vector.broadcast %104 : vector<1x64xf32> to vector<8x64xf32>
    %106 = arith.mulf %103, %105 : vector<8x64xf32>
    %c0_57 = arith.constant 0 : index
    %c0_58 = arith.constant 0 : index
    %107 = vector.load %arg14[%c0_57, %c0_58] : memref<72x64xf32, #tpu.memory_space<vmem>>, vector<8x64xf32>
    tpu.vector_store %arg14[%c0_57, %c0_58], %106 {strides = array<i32>} : memref<72x64xf32, #tpu.memory_space<vmem>>, vector<8x64xf32>,
    %108 = vector.extract_strided_slice %100 {offsets = [0, 56], sizes = [8, 8], strides = [1, 1]} : vector<8x64xf32> to vector<8x8xf32>
    %109 = vector.extract_strided_slice %100 {offsets = [0, 0], sizes = [8, 56], strides = [1, 1]} : vector<8x64xf32> to vector<8x56xf32>
    %110 = tpu.concatenate %108, %109 in 1 : vector<8x8xf32>, vector<8x56xf32> -> vector<8x64xf32>
    %c1_59 = arith.constant 1 : index
    %c0_60 = arith.constant 0 : index
    %111 = vector.load %arg3[%c1_59, %c0_60] : memref<9x64xf32, #tpu.memory_space<vmem>>, vector<1x64xf32>
    %112 = vector.broadcast %111 : vector<1x64xf32> to vector<8x64xf32>
    %113 = arith.mulf %110, %112 : vector<8x64xf32>
    %c8_61 = arith.constant 8 : index
    %c0_62 = arith.constant 0 : index
    %114 = vector.load %arg14[%c8_61, %c0_62] : memref<72x64xf32, #tpu.memory_space<vmem>>, vector<8x64xf32>
    tpu.vector_store %arg14[%c8_61, %c0_62], %113 {strides = array<i32>} : memref<72x64xf32, #tpu.memory_space<vmem>>, vector<8x64xf32>,
    %115 = vector.extract_strided_slice %100 {offsets = [0, 57], sizes = [8, 7], strides = [1, 1]} : vector<8x64xf32> to vector<8x7xf32>
    %116 = vector.extract_strided_slice %100 {offsets = [0, 0], sizes = [8, 57], strides = [1, 1]} : vector<8x64xf32> to vector<8x57xf32>
    %117 = tpu.concatenate %115, %116 in 1 : vector<8x7xf32>, vector<8x57xf32> -> vector<8x64xf32>
    %c2_63 = arith.constant 2 : index
    %c0_64 = arith.constant 0 : index
    %118 = vector.load %arg3[%c2_63, %c0_64] : memref<9x64xf32, #tpu.memory_space<vmem>>, vector<1x64xf32>
    %119 = vector.broadcast %118 : vector<1x64xf32> to vector<8x64xf32>
    %120 = arith.mulf %117, %119 : vector<8x64xf32>
    %c16_65 = arith.constant 16 : index
    %c0_66 = arith.constant 0 : index
    %121 = vector.load %arg14[%c16_65, %c0_66] : memref<72x64xf32, #tpu.memory_space<vmem>>, vector<8x64xf32>
    tpu.vector_store %arg14[%c16_65, %c0_66], %120 {strides = array<i32>} : memref<72x64xf32, #tpu.memory_space<vmem>>, vector<8x64xf32>,
    %122 = vector.extract_strided_slice %100 {offsets = [0, 63], sizes = [8, 1], strides = [1, 1]} : vector<8x64xf32> to vector<8x1xf32>
    %123 = vector.extract_strided_slice %100 {offsets = [0, 0], sizes = [8, 63], strides = [1, 1]} : vector<8x64xf32> to vector<8x63xf32>
    %124 = tpu.concatenate %122, %123 in 1 : vector<8x1xf32>, vector<8x63xf32> -> vector<8x64xf32>
    %c3_67 = arith.constant 3 : index
    %c0_68 = arith.constant 0 : index
    %125 = vector.load %arg3[%c3_67, %c0_68] : memref<9x64xf32, #tpu.memory_space<vmem>>, vector<1x64xf32>
    %126 = vector.broadcast %125 : vector<1x64xf32> to vector<8x64xf32>
    %127 = arith.mulf %124, %126 : vector<8x64xf32>
    %c24_69 = arith.constant 24 : index
    %c0_70 = arith.constant 0 : index
    %128 = vector.load %arg14[%c24_69, %c0_70] : memref<72x64xf32, #tpu.memory_space<vmem>>, vector<8x64xf32>
    tpu.vector_store %arg14[%c24_69, %c0_70], %127 {strides = array<i32>} : memref<72x64xf32, #tpu.memory_space<vmem>>, vector<8x64xf32>,
    %c32_71 = arith.constant 32 : index
    %c0_72 = arith.constant 0 : index
    %129 = vector.load %arg14[%c32_71, %c0_72] : memref<72x64xf32, #tpu.memory_space<vmem>>, vector<8x64xf32>
    tpu.vector_store %arg14[%c32_71, %c0_72], %100 {strides = array<i32>} : memref<72x64xf32, #tpu.memory_space<vmem>>, vector<8x64xf32>,
    %130 = vector.extract_strided_slice %100 {offsets = [0, 1], sizes = [8, 63], strides = [1, 1]} : vector<8x64xf32> to vector<8x63xf32>
    %131 = vector.extract_strided_slice %100 {offsets = [0, 0], sizes = [8, 1], strides = [1, 1]} : vector<8x64xf32> to vector<8x1xf32>
    %132 = tpu.concatenate %130, %131 in 1 : vector<8x63xf32>, vector<8x1xf32> -> vector<8x64xf32>
    %c5_73 = arith.constant 5 : index
    %c0_74 = arith.constant 0 : index
    %133 = vector.load %arg3[%c5_73, %c0_74] : memref<9x64xf32, #tpu.memory_space<vmem>>, vector<1x64xf32>
    %134 = vector.broadcast %133 : vector<1x64xf32> to vector<8x64xf32>
    %135 = arith.mulf %132, %134 : vector<8x64xf32>
    %c40 = arith.constant 40 : index
    %c0_75 = arith.constant 0 : index
    %136 = vector.load %arg14[%c40, %c0_75] : memref<72x64xf32, #tpu.memory_space<vmem>>, vector<8x64xf32>
    tpu.vector_store %arg14[%c40, %c0_75], %135 {strides = array<i32>} : memref<72x64xf32, #tpu.memory_space<vmem>>, vector<8x64xf32>,
    %137 = vector.extract_strided_slice %100 {offsets = [0, 7], sizes = [8, 57], strides = [1, 1]} : vector<8x64xf32> to vector<8x57xf32>
    %138 = vector.extract_strided_slice %100 {offsets = [0, 0], sizes = [8, 7], strides = [1, 1]} : vector<8x64xf32> to vector<8x7xf32>
    %139 = tpu.concatenate %137, %138 in 1 : vector<8x57xf32>, vector<8x7xf32> -> vector<8x64xf32>
    %c6_76 = arith.constant 6 : index
    %c0_77 = arith.constant 0 : index
    %140 = vector.load %arg3[%c6_76, %c0_77] : memref<9x64xf32, #tpu.memory_space<vmem>>, vector<1x64xf32>
    %141 = vector.broadcast %140 : vector<1x64xf32> to vector<8x64xf32>
    %142 = arith.mulf %139, %141 : vector<8x64xf32>
    %c48 = arith.constant 48 : index
    %c0_78 = arith.constant 0 : index
    %143 = vector.load %arg14[%c48, %c0_78] : memref<72x64xf32, #tpu.memory_space<vmem>>, vector<8x64xf32>
    tpu.vector_store %arg14[%c48, %c0_78], %142 {strides = array<i32>} : memref<72x64xf32, #tpu.memory_space<vmem>>, vector<8x64xf32>,
    %144 = vector.extract_strided_slice %100 {offsets = [0, 8], sizes = [8, 56], strides = [1, 1]} : vector<8x64xf32> to vector<8x56xf32>
    %145 = vector.extract_strided_slice %100 {offsets = [0, 0], sizes = [8, 8], strides = [1, 1]} : vector<8x64xf32> to vector<8x8xf32>
    %146 = tpu.concatenate %144, %145 in 1 : vector<8x56xf32>, vector<8x8xf32> -> vector<8x64xf32>
    %c7_79 = arith.constant 7 : index
    %c0_80 = arith.constant 0 : index
    %147 = vector.load %arg3[%c7_79, %c0_80] : memref<9x64xf32, #tpu.memory_space<vmem>>, vector<1x64xf32>
    %148 = vector.broadcast %147 : vector<1x64xf32> to vector<8x64xf32>
    %149 = arith.mulf %146, %148 : vector<8x64xf32>
    %c56 = arith.constant 56 : index
    %c0_81 = arith.constant 0 : index
    %150 = vector.load %arg14[%c56, %c0_81] : memref<72x64xf32, #tpu.memory_space<vmem>>, vector<8x64xf32>
    tpu.vector_store %arg14[%c56, %c0_81], %149 {strides = array<i32>} : memref<72x64xf32, #tpu.memory_space<vmem>>, vector<8x64xf32>,
    %151 = vector.extract_strided_slice %100 {offsets = [0, 9], sizes = [8, 55], strides = [1, 1]} : vector<8x64xf32> to vector<8x55xf32>
    %152 = vector.extract_strided_slice %100 {offsets = [0, 0], sizes = [8, 9], strides = [1, 1]} : vector<8x64xf32> to vector<8x9xf32>
    %153 = tpu.concatenate %151, %152 in 1 : vector<8x55xf32>, vector<8x9xf32> -> vector<8x64xf32>
    %c8_82 = arith.constant 8 : index
    %c0_83 = arith.constant 0 : index
    %154 = vector.load %arg3[%c8_82, %c0_83] : memref<9x64xf32, #tpu.memory_space<vmem>>, vector<1x64xf32>
    %155 = vector.broadcast %154 : vector<1x64xf32> to vector<8x64xf32>
    %156 = arith.mulf %153, %155 : vector<8x64xf32>
    %c64 = arith.constant 64 : index
    %c0_84 = arith.constant 0 : index
    %157 = vector.load %arg14[%c64, %c0_84] : memref<72x64xf32, #tpu.memory_space<vmem>>, vector<8x64xf32>
    tpu.vector_store %arg14[%c64, %c0_84], %156 {strides = array<i32>} : memref<72x64xf32, #tpu.memory_space<vmem>>, vector<8x64xf32>,
    %c0_85 = arith.constant 0 : index
    %c0_86 = arith.constant 0 : index
    %158 = vector.load %arg14[%c0_85, %c0_86] : memref<72x64xf32, #tpu.memory_space<vmem>>, vector<72x64xf32>
    %c0_87 = arith.constant 0 : index
    %c0_88 = arith.constant 0 : index
    %159 = vector.load %arg8[%c0_87, %c0_88] : memref<8x72xbf16, #tpu.memory_space<vmem>>, vector<8x72xbf16>
    %160 = arith.truncf %158 : vector<72x64xf32> to vector<72x64xbf16>
    %cst_89 = arith.constant dense<0.000000e+00> : vector<8x64xf32>
    %161 = tpu.matmul %159, %160, %cst_89 {dimension_numbers = #tpu.dot_dimension_numbers<[1], [0], [0], [1], [0, 0, 1, 1], [], []>} : vector<8x72xbf16>, vector<72x64xbf16>, vector<8x64xf32> -> vector<8x64xf32>
    %c0_90 = arith.constant 0 : index
    %c0_91 = arith.constant 0 : index
    %162 = vector.load %arg9[%c0_90, %c0_91] : memref<8x1xf32, #tpu.memory_space<vmem>>, vector<8x1xf32>
    %163 = vector.broadcast %162 : vector<8x1xf32> to vector<8x64xf32>
    %164 = arith.addf %161, %163 : vector<8x64xf32>
    %165 = arith.addf %164, %31 : vector<8x64xf32>
    %166 = math.tanh %165 : vector<8x64xf32>
    %cst_92 = arith.constant 5.000000e-01 : f32
    %167 = vector.broadcast %cst_92 : f32 to vector<8x64xf32>
    %168 = arith.mulf %167, %166 : vector<8x64xf32>
    %cst_93 = arith.constant 5.000000e-01 : f32
    %169 = vector.broadcast %cst_93 : f32 to vector<8x64xf32>
    %170 = arith.addf %168, %169 : vector<8x64xf32>
    %c0_94 = arith.constant 0 : index
    %c0_95 = arith.constant 0 : index
    %c0_96 = arith.constant 0 : index
    %171 = vector.load %arg12[%c0_94, %c0_95, %c0_96] : memref<1x8x64xf32, #tpu.memory_space<vmem>>, vector<1x8x64xf32>
    %172 = vector.shape_cast %171 : vector<1x8x64xf32> to vector<8x64xf32>
    %173 = vector.shape_cast %170 : vector<8x64xf32> to vector<1x8x64xf32>
    tpu.vector_store %arg12[%c0_94, %c0_95, %c0_96], %173 {strides = array<i32>} : memref<1x8x64xf32, #tpu.memory_space<vmem>>, vector<1x8x64xf32>,
    return
  }
  func.func @transform_0(%arg0: i32) -> (i32, i32, i32) {
    %c0_i32 = arith.constant 0 : i32
    %c0_i32_0 = arith.constant 0 : i32
    %c0_i32_1 = arith.constant 0 : i32
    return %arg0, %c0_i32, %c0_i32_0 : i32, i32, i32
  }
  func.func @transform_1(%arg0: i32) -> (i32, i32, i32) {
    %c0_i32 = arith.constant 0 : i32
    %c0_i32_0 = arith.constant 0 : i32
    %c0_i32_1 = arith.constant 0 : i32
    %c0_i32_2 = arith.constant 0 : i32
    return %c0_i32, %c0_i32_0, %c0_i32_1 : i32, i32, i32
  }
  func.func @transform_2(%arg0: i32) -> (i32, i32) {
    %c0_i32 = arith.constant 0 : i32
    %c0_i32_0 = arith.constant 0 : i32
    %c0_i32_1 = arith.constant 0 : i32
    return %c0_i32, %c0_i32_0 : i32, i32
  }
  func.func @transform_3(%arg0: i32) -> (i32, i32) {
    %c0_i32 = arith.constant 0 : i32
    %c0_i32_0 = arith.constant 0 : i32
    %c0_i32_1 = arith.constant 0 : i32
    return %c0_i32, %c0_i32_0 : i32, i32
  }
  func.func @transform_4(%arg0: i32) -> (i32, i32) {
    %c0_i32 = arith.constant 0 : i32
    %c0_i32_0 = arith.constant 0 : i32
    %c0_i32_1 = arith.constant 0 : i32
    return %c0_i32, %c0_i32_0 : i32, i32
  }
  func.func @transform_5(%arg0: i32) -> (i32, i32) {
    %c0_i32 = arith.constant 0 : i32
    %c0_i32_0 = arith.constant 0 : i32
    %c0_i32_1 = arith.constant 0 : i32
    return %c0_i32, %c0_i32_0 : i32, i32
  }
  func.func @transform_6(%arg0: i32) -> (i32, i32) {
    %c0_i32 = arith.constant 0 : i32
    %c0_i32_0 = arith.constant 0 : i32
    %c0_i32_1 = arith.constant 0 : i32
    return %c0_i32, %c0_i32_0 : i32, i32
  }
  func.func @transform_7(%arg0: i32) -> (i32, i32) {
    %c0_i32 = arith.constant 0 : i32
    %c0_i32_0 = arith.constant 0 : i32
    %c0_i32_1 = arith.constant 0 : i32
    return %c0_i32, %c0_i32_0 : i32, i32
  }
  func.func @transform_8(%arg0: i32) -> (i32, i32) {
    %c0_i32 = arith.constant 0 : i32
    %c0_i32_0 = arith.constant 0 : i32
    %c0_i32_1 = arith.constant 0 : i32
    return %c0_i32, %c0_i32_0 : i32, i32
  }
  func.func @transform_9(%arg0: i32) -> (i32, i32) {
    %c0_i32 = arith.constant 0 : i32
    %c0_i32_0 = arith.constant 0 : i32
    %c0_i32_1 = arith.constant 0 : i32
    return %c0_i32, %c0_i32_0 : i32, i32
  }
  func.func @transform_10(%arg0: i32) -> (i32, i32) {
    %c0_i32 = arith.constant 0 : i32
    %c0_i32_0 = arith.constant 0 : i32
    %c0_i32_1 = arith.constant 0 : i32
    return %c0_i32, %c0_i32_0 : i32, i32
  }
  func.func @transform_11(%arg0: i32) -> (i32, i32, i32) {
    %c0_i32 = arith.constant 0 : i32
    %c0_i32_0 = arith.constant 0 : i32
    %c0_i32_1 = arith.constant 0 : i32
    return %arg0, %c0_i32, %c0_i32_0 : i32, i32, i32
  }
}

</mosaic_0001>

<llo_original>
// kernel: downsampling_block.1
$region0: #{downsampling_block.1}
  #allocation0 [shape = 'u32[]', space=smem, size = 0x4, offset = 0x4, fixed_abs, tag = 'smem constant byte address 0x4 - core index']
  #allocation1 [shape = 'u32[144,128]{1,0:T(1,128)}', space=vmem, size = 0x12000, scoped, tag = 'internal scratch']
  #allocation2 [shape = 'f32[36,64]{1,0:T(8,128)}', space=vmem, size = 0x5000, scoped, tag = 'scratch operand']
  #allocation3 [shape = 'f32[72,64]{1,0:T(8,128)}', space=vmem, size = 0x9000, scoped, tag = 'scratch operand']
  %s0 = inlined_call_operand.vmem [shape: f32[2,4,256], index: 0, kind: input, shape index: {}]
  %s1 = inlined_call_operand.vmem [shape: f32[4,256,64], index: 1, kind: input, shape index: {}]
  %s2 = inlined_call_operand.vmem [shape: f32[9,64], index: 2, kind: input, shape index: {}]
  %s3 = inlined_call_operand.vmem [shape: f32[4,1], index: 3, kind: input, shape index: {}]
  %s4 = inlined_call_operand.vmem [shape: f32[4,1], index: 4, kind: input, shape index: {}]
  %s5 = inlined_call_operand.vmem [shape: bf16[8,36], index: 5, kind: input, shape index: {}]
  %s6 = inlined_call_operand.vmem [shape: f32[8,1], index: 6, kind: input, shape index: {}]
  %s7 = inlined_call_operand.vmem [shape: bf16[8,72], index: 7, kind: input, shape index: {}]
  %s8 = inlined_call_operand.vmem [shape: f32[8,1], index: 8, kind: input, shape index: {}]
  %s9 = inlined_call_operand.vmem [shape: bf16[8,4], index: 9, kind: input, shape index: {}]
  %s10 = inlined_call_operand.vmem [shape: f32[8,1], index: 10, kind: input, shape index: {}]
  %s11 = inlined_call_operand.vmem [shape: f32[2,8,64], index: 11, kind: output, shape index: {}]
  %s12 = sld [smem:[#allocation0]]
  $region77: #{downsampling_block.1} parent=0
    _
  %s14 = ssub.s32 1, %s12
  %s15 = scalar_select 0, %s14, %s12
  loop: start=0, step=1, limit=4
  $region2: #{downsampling_block.1} parent=0 // loop_pre_header
    _
  $region3: #{downsampling_block.1} parent=0 // loop_header
    %s17 = sphi 0, %s21
    %p18 = scmp.ge.s32.totalorder %s17, 4
    %s27 = sphi 0, %s29
    %s30 = sphi 0, %s27
    %s31 = sphi 0, %s30
    %s47 = sphi 0, %s31
    %s51 = sphi 0, %s51
    %s53 = sphi 0, %s51
    %s54 = sphi 0, %s53
    %s68 = sphi 0, %s54
    %s72 = sphi 0, %s72
    %s74 = sphi 0, %s72
    %s75 = sphi 0, %s74
    %s89 = sphi 0, %s75
    %s93 = sphi 0, %s93
    %s95 = sphi 0, %s93
    %s96 = sphi 0, %s95
    %s110 = sphi 0, %s96
    %s114 = sphi 0, %s114
    %s116 = sphi 0, %s114
    %s117 = sphi 0, %s116
    %s131 = sphi 0, %s117
    %s135 = sphi 0, %s135
    %s137 = sphi 0, %s135
    %s138 = sphi 0, %s137
    %s152 = sphi 0, %s138
    %s156 = sphi 0, %s156
    %s158 = sphi 0, %s156
    %s159 = sphi 0, %s158
    %s173 = sphi 0, %s159
    %s177 = sphi 0, %s177
    %s179 = sphi 0, %s177
    %s180 = sphi 0, %s179
    %s194 = sphi 0, %s180
    %s198 = sphi 0, %s198
    %s200 = sphi 0, %s198
    %s201 = sphi 0, %s200
    %s215 = sphi 0, %s201
    %s219 = sphi 0, %s219
    %s221 = sphi 0, %s219
    %s222 = sphi 0, %s221
    %s236 = sphi 0, %s222
    %s240 = sphi 0, %s240
    %s242 = sphi 0, %s240
    %s243 = sphi 0, %s242
    %s257 = sphi 0, %s243
    %s263 = sphi 0, %s265
    %s266 = sphi 0, %s263
    %s267 = sphi 0, %s266
    %s283 = sphi 0, %s267
  $region4: #{downsampling_block.1} parent=0 // loop_header_branch
    %20 = sbr.rel (%p18) target = $region8
  $region5: #{downsampling_block.1} parent=0 // loop_body
    %s22 = ssub.s32 %s17, 1
    %s23 = ssub.s32 %s17, 2
    %s24 = sadd.s32 %s17, 1
    %s25 = ssub.s32 %s17, %s24
    %p26 = scmp.eq.s32.totalorder %s25, 0
    %s28 = sadd.s32 %s27, 1
    %s29 = scalar_select %p26, %s27, %s28
    %p32 = pneg %p26
    %p33 = scmp.eq.s32.totalorder %s17, 1
    %p34 = por %p32, %p33
    %p35 = scmp.ne.s32.totalorder %s27, %s30
    %p36 = scmp.eq.s32.totalorder %s17, 0
    %p37 = por %p35, %p36
    %p38 = scmp.ne.s32.totalorder %s27, %s30
    %p39 = scmp.eq.s32.totalorder %s22, 1
    %p40 = por %p38, %p39
    %p41 = scmp.ne.s32.totalorder %s30, %s31
    %p42 = scmp.eq.s32.totalorder %s22, 0
    %p43 = por %p41, %p42
    %p44 = scmp.ne.s32.totalorder %s30, %s31
    %p45 = scmp.eq.s32.totalorder %s23, 1
    %p46 = por %p44, %p45
    %p48 = scmp.ne.s32.totalorder %s31, %s47
    %p49 = scmp.eq.s32.totalorder %s23, 0
    %p50 = por %p48, %p49
    %s52 = sadd.s32 %s51, 1
    %p55 = scmp.eq.s32.totalorder %s17, 1
    %p56 = scmp.ne.s32.totalorder %s51, %s53
    %p57 = scmp.eq.s32.totalorder %s17, 0
    %p58 = por %p56, %p57
    %p59 = scmp.ne.s32.totalorder %s51, %s53
    %p60 = scmp.eq.s32.totalorder %s22, 1
    %p61 = por %p59, %p60
    %p62 = scmp.ne.s32.totalorder %s53, %s54
    %p63 = scmp.eq.s32.totalorder %s22, 0
    %p64 = por %p62, %p63
    %p65 = scmp.ne.s32.totalorder %s53, %s54
    %p66 = scmp.eq.s32.totalorder %s23, 1
    %p67 = por %p65, %p66
    %p69 = scmp.ne.s32.totalorder %s54, %s68
    %p70 = scmp.eq.s32.totalorder %s23, 0
    %p71 = por %p69, %p70
    %s73 = sadd.s32 %s72, 1
    %p76 = scmp.eq.s32.totalorder %s17, 1
    %p77 = scmp.ne.s32.totalorder %s72, %s74
    %p78 = scmp.eq.s32.totalorder %s17, 0
    %p79 = por %p77, %p78
    %p80 = scmp.ne.s32.totalorder %s72, %s74
    %p81 = scmp.eq.s32.totalorder %s22, 1
    %p82 = por %p80, %p81
    %p83 = scmp.ne.s32.totalorder %s74, %s75
    %p84 = scmp.eq.s32.totalorder %s22, 0
    %p85 = por %p83, %p84
    %p86 = scmp.ne.s32.totalorder %s74, %s75
    %p87 = scmp.eq.s32.totalorder %s23, 1
    %p88 = por %p86, %p87
    %p90 = scmp.ne.s32.totalorder %s75, %s89
    %p91 = scmp.eq.s32.totalorder %s23, 0
    %p92 = por %p90, %p91
    %s94 = sadd.s32 %s93, 1
    %p97 = scmp.eq.s32.totalorder %s17, 1
    %p98 = scmp.ne.s32.totalorder %s93, %s95
    %p99 = scmp.eq.s32.totalorder %s17, 0
    %p100 = por %p98, %p99
    %p101 = scmp.ne.s32.totalorder %s93, %s95
    %p102 = scmp.eq.s32.totalorder %s22, 1
    %p103 = por %p101, %p102
    %p104 = scmp.ne.s32.totalorder %s95, %s96
    %p105 = scmp.eq.s32.totalorder %s22, 0
    %p106 = por %p104, %p105
    %p107 = scmp.ne.s32.totalorder %s95, %s96
    %p108 = scmp.eq.s32.totalorder %s23, 1
    %p109 = por %p107, %p108
    %p111 = scmp.ne.s32.totalorder %s96, %s110
    %p112 = scmp.eq.s32.totalorder %s23, 0
    %p113 = por %p111, %p112
    %s115 = sadd.s32 %s114, 1
    %p118 = scmp.eq.s32.totalorder %s17, 1
    %p119 = scmp.ne.s32.totalorder %s114, %s116
    %p120 = scmp.eq.s32.totalorder %s17, 0
    %p121 = por %p119, %p120
    %p122 = scmp.ne.s32.totalorder %s114, %s116
    %p123 = scmp.eq.s32.totalorder %s22, 1
    %p124 = por %p122, %p123
    %p125 = scmp.ne.s32.totalorder %s116, %s117
    %p126 = scmp.eq.s32.totalorder %s22, 0
    %p127 = por %p125, %p126
    %p128 = scmp.ne.s32.totalorder %s116, %s117
    %p129 = scmp.eq.s32.totalorder %s23, 1
    %p130 = por %p128, %p129
    %p132 = scmp.ne.s32.totalorder %s117, %s131
    %p133 = scmp.eq.s32.totalorder %s23, 0
    %p134 = por %p132, %p133
    %s136 = sadd.s32 %s135, 1
    %p139 = scmp.eq.s32.totalorder %s17, 1
    %p140 = scmp.ne.s32.totalorder %s135, %s137
    %p141 = scmp.eq.s32.totalorder %s17, 0
    %p142 = por %p140, %p141
    %p143 = scmp.ne.s32.totalorder %s135, %s137
    %p144 = scmp.eq.s32.totalorder %s22, 1
    %p145 = por %p143, %p144
    %p146 = scmp.ne.s32.totalorder %s137, %s138
    %p147 = scmp.eq.s32.totalorder %s22, 0
    %p148 = por %p146, %p147
    %p149 = scmp.ne.s32.totalorder %s137, %s138
    %p150 = scmp.eq.s32.totalorder %s23, 1
    %p151 = por %p149, %p150
    %p153 = scmp.ne.s32.totalorder %s138, %s152
    %p154 = scmp.eq.s32.totalorder %s23, 0
    %p155 = por %p153, %p154
    %s157 = sadd.s32 %s156, 1
    %p160 = scmp.eq.s32.totalorder %s17, 1
    %p161 = scmp.ne.s32.totalorder %s156, %s158
    %p162 = scmp.eq.s32.totalorder %s17, 0
    %p163 = por %p161, %p162
    %p164 = scmp.ne.s32.totalorder %s156, %s158
    %p165 = scmp.eq.s32.totalorder %s22, 1
    %p166 = por %p164, %p165
    %p167 = scmp.ne.s32.totalorder %s158, %s159
    %p168 = scmp.eq.s32.totalorder %s22, 0
    %p169 = por %p167, %p168
    %p170 = scmp.ne.s32.totalorder %s158, %s159
    %p171 = scmp.eq.s32.totalorder %s23, 1
    %p172 = por %p170, %p171
    %p174 = scmp.ne.s32.totalorder %s159, %s173
    %p175 = scmp.eq.s32.totalorder %s23, 0
    %p176 = por %p174, %p175
    %s178 = sadd.s32 %s177, 1
    %p181 = scmp.eq.s32.totalorder %s17, 1
    %p182 = scmp.ne.s32.totalorder %s177, %s179
    %p183 = scmp.eq.s32.totalorder %s17, 0
    %p184 = por %p182, %p183
    %p185 = scmp.ne.s32.totalorder %s177, %s179
    %p186 = scmp.eq.s32.totalorder %s22, 1
    %p187 = por %p185, %p186
    %p188 = scmp.ne.s32.totalorder %s179, %s180
    %p189 = scmp.eq.s32.totalorder %s22, 0
    %p190 = por %p188, %p189
    %p191 = scmp.ne.s32.totalorder %s179, %s180
    %p192 = scmp.eq.s32.totalorder %s23, 1
    %p193 = por %p191, %p192
    %p195 = scmp.ne.s32.totalorder %s180, %s194
    %p196 = scmp.eq.s32.totalorder %s23, 0
    %p197 = por %p195, %p196
    %s199 = sadd.s32 %s198, 1
    %p202 = scmp.eq.s32.totalorder %s17, 1
    %p203 = scmp.ne.s32.totalorder %s198, %s200
    %p204 = scmp.eq.s32.totalorder %s17, 0
    %p205 = por %p203, %p204
    %p206 = scmp.ne.s32.totalorder %s198, %s200
    %p207 = scmp.eq.s32.totalorder %s22, 1
    %p208 = por %p206, %p207
    %p209 = scmp.ne.s32.totalorder %s200, %s201
    %p210 = scmp.eq.s32.totalorder %s22, 0
    %p211 = por %p209, %p210
    %p212 = scmp.ne.s32.totalorder %s200, %s201
    %p213 = scmp.eq.s32.totalorder %s23, 1
    %p214 = por %p212, %p213
    %p216 = scmp.ne.s32.totalorder %s201, %s215
    %p217 = scmp.eq.s32.totalorder %s23, 0
    %p218 = por %p216, %p217
    %s220 = sadd.s32 %s219, 1
    %p223 = scmp.eq.s32.totalorder %s17, 1
    %p224 = scmp.ne.s32.totalorder %s219, %s221
    %p225 = scmp.eq.s32.totalorder %s17, 0
    %p226 = por %p224, %p225
    %p227 = scmp.ne.s32.totalorder %s219, %s221
    %p228 = scmp.eq.s32.totalorder %s22, 1
    %p229 = por %p227, %p228
    %p230 = scmp.ne.s32.totalorder %s221, %s222
    %p231 = scmp.eq.s32.totalorder %s22, 0
    %p232 = por %p230, %p231
    %p233 = scmp.ne.s32.totalorder %s221, %s222
    %p234 = scmp.eq.s32.totalorder %s23, 1
    %p235 = por %p233, %p234
    %p237 = scmp.ne.s32.totalorder %s222, %s236
    %p238 = scmp.eq.s32.totalorder %s23, 0
    %p239 = por %p237, %p238
    %s241 = sadd.s32 %s240, 1
    %p244 = scmp.eq.s32.totalorder %s17, 1
    %p245 = scmp.ne.s32.totalorder %s240, %s242
    %p246 = scmp.eq.s32.totalorder %s17, 0
    %p247 = por %p245, %p246
    %p248 = scmp.ne.s32.totalorder %s240, %s242
    %p249 = scmp.eq.s32.totalorder %s22, 1
    %p250 = por %p248, %p249
    %p251 = scmp.ne.s32.totalorder %s242, %s243
    %p252 = scmp.eq.s32.totalorder %s22, 0
    %p253 = por %p251, %p252
    %p254 = scmp.ne.s32.totalorder %s242, %s243
    %p255 = scmp.eq.s32.totalorder %s23, 1
    %p256 = por %p254, %p255
    %p258 = scmp.ne.s32.totalorder %s243, %s257
    %p259 = scmp.eq.s32.totalorder %s23, 0
    %p260 = por %p258, %p259
    %s261 = ssub.s32 %s17, %s24
    %p262 = scmp.eq.s32.totalorder %s261, 0
    %s264 = sadd.s32 %s263, 1
    %s265 = scalar_select %p262, %s263, %s264
    %p268 = pneg %p262
    %p269 = scmp.eq.s32.totalorder %s17, 1
    %p270 = por %p268, %p269
    %p271 = scmp.ne.s32.totalorder %s263, %s266
    %p272 = scmp.eq.s32.totalorder %s17, 0
    %p273 = por %p271, %p272
    %p274 = scmp.ne.s32.totalorder %s263, %s266
    %p275 = scmp.eq.s32.totalorder %s22, 1
    %p276 = por %p274, %p275
    %p277 = scmp.ne.s32.totalorder %s266, %s267
    %p278 = scmp.eq.s32.totalorder %s22, 0
    %p279 = por %p277, %p278
    %p280 = scmp.ne.s32.totalorder %s266, %s267
    %p281 = scmp.eq.s32.totalorder %s23, 1
    %p282 = por %p280, %p281
    %p284 = scmp.ne.s32.totalorder %s267, %s283
    %p285 = scmp.eq.s32.totalorder %s23, 0
    %p286 = por %p284, %p285
    %p287 = scmp.le.s32.totalorder 1, %s17
    %p288 = scmp.lt.s32.totalorder %s17, 3
    %p289 = pnand %p287, %p288
    %p290 = pneg %p289
    // Predicated region
    $region9: #{downsampling_block.1} parent=5 // pred_check
      _
    $region10: #{downsampling_block.1} parent=5 // pred_check_branch
      %292 = sbr.rel (%p289) target = $region12
    $region11: #{downsampling_block.1} parent=5 // pred_region
      %s293 = ssub.s32 %s17, 1
      // Predicated region
      $region13: #{downsampling_block.1} parent=11 // pred_check
        %p294 = pneg %p64
      $region14: #{downsampling_block.1} parent=11 // pred_check_branch
        %296 = sbr.rel (%p294) target = $region16
      $region15: #{downsampling_block.1} parent=11 // pred_region
        _
      $region16: #{downsampling_block.1} parent=11 // pred_fallthru
        _
      // Predicated region
      $region17: #{downsampling_block.1} parent=11 // pred_check
        %p297 = pneg %p85
      $region18: #{downsampling_block.1} parent=11 // pred_check_branch
        %299 = sbr.rel (%p297) target = $region20
      $region19: #{downsampling_block.1} parent=11 // pred_region
        _
      $region20: #{downsampling_block.1} parent=11 // pred_fallthru
        _
      // Predicated region
      $region21: #{downsampling_block.1} parent=11 // pred_check
        %p300 = pneg %p106
      $region22: #{downsampling_block.1} parent=11 // pred_check_branch
        %302 = sbr.rel (%p300) target = $region24
      $region23: #{downsampling_block.1} parent=11 // pred_region
        _
      $region24: #{downsampling_block.1} parent=11 // pred_fallthru
        _
      // Predicated region
      $region25: #{downsampling_block.1} parent=11 // pred_check
        %p303 = pneg %p127
      $region26: #{downsampling_block.1} parent=11 // pred_check_branch
        %305 = sbr.rel (%p303) target = $region28
      $region27: #{downsampling_block.1} parent=11 // pred_region
        _
      $region28: #{downsampling_block.1} parent=11 // pred_fallthru
        _
      // Predicated region
      $region29: #{downsampling_block.1} parent=11 // pred_check
        %p306 = pneg %p148
      $region30: #{downsampling_block.1} parent=11 // pred_check_branch
        %308 = sbr.rel (%p306) target = $region32
      $region31: #{downsampling_block.1} parent=11 // pred_region
        _
      $region32: #{downsampling_block.1} parent=11 // pred_fallthru
        _
      // Predicated region
      $region33: #{downsampling_block.1} parent=11 // pred_check
        %p309 = pneg %p169
      $region34: #{downsampling_block.1} parent=11 // pred_check_branch
        %311 = sbr.rel (%p309) target = $region36
      $region35: #{downsampling_block.1} parent=11 // pred_region
        _
      $region36: #{downsampling_block.1} parent=11 // pred_fallthru
        _
      // Predicated region
      $region37: #{downsampling_block.1} parent=11 // pred_check
        %p312 = pneg %p190
      $region38: #{downsampling_block.1} parent=11 // pred_check_branch
        %314 = sbr.rel (%p312) target = $region40
      $region39: #{downsampling_block.1} parent=11 // pred_region
        _
      $region40: #{downsampling_block.1} parent=11 // pred_fallthru
        _
      // Predicated region
      $region41: #{downsampling_block.1} parent=11 // pred_check
        %p315 = pneg %p211
      $region42: #{downsampling_block.1} parent=11 // pred_check_branch
        %317 = sbr.rel (%p315) target = $region44
      $region43: #{downsampling_block.1} parent=11 // pred_region
        _
      $region44: #{downsampling_block.1} parent=11 // pred_fallthru
        _
      // Predicated region
      $region45: #{downsampling_block.1} parent=11 // pred_check
        %p318 = pneg %p232
      $region46: #{downsampling_block.1} parent=11 // pred_check_branch
        %320 = sbr.rel (%p318) target = $region48
      $region47: #{downsampling_block.1} parent=11 // pred_region
        _
      $region48: #{downsampling_block.1} parent=11 // pred_fallthru
        _
      // Predicated region
      $region49: #{downsampling_block.1} parent=11 // pred_check
        %p321 = pneg %p253
      $region50: #{downsampling_block.1} parent=11 // pred_check_branch
        %323 = sbr.rel (%p321) target = $region52
      $region51: #{downsampling_block.1} parent=11 // pred_region
        _
      $region52: #{downsampling_block.1} parent=11 // pred_fallthru
        _
    $region12: #{downsampling_block.1} parent=5 // pred_fallthru
      _
    %p324 = scmp.lt.s32.totalorder %s17, 2
    // Predicated region
    $region53: #{downsampling_block.1} parent=5 // pred_check
      %p325 = pneg %p324
    $region54: #{downsampling_block.1} parent=5 // pred_check_branch
      %327 = sbr.rel (%p325) target = $region56
    $region55: #{downsampling_block.1} parent=5 // pred_region
      // Predicated region
      $region57: #{downsampling_block.1} parent=55 // pred_check
        %p328 = pneg %p37
      $region58: #{downsampling_block.1} parent=55 // pred_check_branch
        %330 = sbr.rel (%p328) target = $region60
      $region59: #{downsampling_block.1} parent=55 // pred_region
        %p331 = scmp.lt.s32.totalorder %s17, 1
        %s332 = scalar_select %p331, %s17, 1
        %s333 = smul.addr %s332, 2
        %s334 = smul.addr %s333, 4
        %s335 = scalar_lea.vmem %s0, %s334
      $region60: #{downsampling_block.1} parent=55 // pred_fallthru
        _
    $region56: #{downsampling_block.1} parent=5 // pred_fallthru
      _
    %p336 = scmp.le.s32.totalorder 1, %s17
    %p337 = scmp.lt.s32.totalorder %s17, 3
    %p338 = pnand %p336, %p337
    %p339 = pneg %p338
    // Predicated region
    $region61: #{downsampling_block.1} parent=5 // pred_check
      _
    $region62: #{downsampling_block.1} parent=5 // pred_check_branch
      %341 = sbr.rel (%p338) target = $region64
    $region63: #{downsampling_block.1} parent=5 // pred_region
      %s342 = ssub.s32 %s17, 1
      %p343 = scmp.lt.s32.totalorder %s22, 1
      %s344 = scalar_select %p343, %s22, 1
      %s345 = smul.addr %s344, 2
      %s346 = smul.addr %s345, 4
      %s347 = scalar_lea.vmem %s0, %s346
      %p348 = pneg %p43
      %p349 = pneg %p40
      %p350 = pneg %p64
      %p351 = pneg %p61
      %p352 = pneg %p85
      %p353 = pneg %p82
      %p354 = pneg %p106
      %p355 = pneg %p103
      %p356 = pneg %p127
      %p357 = pneg %p124
      %p358 = pneg %p148
      %p359 = pneg %p145
      %p360 = pneg %p169
      %p361 = pneg %p166
      %p362 = pneg %p190
      %p363 = pneg %p187
      %p364 = pneg %p211
      %p365 = pneg %p208
      %p366 = pneg %p232
      %p367 = pneg %p229
      %p368 = pneg %p253
      %p369 = pneg %p250
      %p370 = pneg %p279
      %p371 = pneg %p276
      %p372 = scmp.lt.s32.totalorder %s22, 1
      %s373 = scalar_select %p372, %s22, 1
      %s374 = smul.addr %s373, 8
      %s375 = scalar_lea.vmem %s11, %s374
      %p376 = scmp.lt.s32.totalorder %s22, 1
      %s377 = scalar_select %p376, %s22, 1
      %s378 = smul.addr %s377, 2
      %s379 = smul.addr %s378, 4
      %s380 = scalar_lea.vmem %s0, %s379
      %p381 = scmp.lt.s32.totalorder %s22, 1
      %s382 = scalar_select %p381, %s22, 1
      %s383 = smul.addr %s382, 8
      %s384 = scalar_lea.vmem %s11, %s383
      %v386 = vld [vmem:[%s380] sm:$0xff]
      %v387 = vld [vmem:[%s1] sm:$0xff]
      %v388 = vld [vmem:[%s1 + $0x8] sm:$0xff]
      %v389 = vld [vmem:[%s1 + $0x10] sm:$0xff]
      %v390 = vld [vmem:[%s1 + $0x18] sm:$0xff]
      %v391 = vld [vmem:[%s1 + $0x20] sm:$0xff]
      %v392 = vld [vmem:[%s1 + $0x28] sm:$0xff]
      %v393 = vld [vmem:[%s1 + $0x30] sm:$0xff]
      %v394 = vld [vmem:[%s1 + $0x38] sm:$0xff]
      %v395 = vld [vmem:[%s1 + $0x40] sm:$0xff]
      %v396 = vld [vmem:[%s1 + $0x48] sm:$0xff]
      %v397 = vld [vmem:[%s1 + $0x50] sm:$0xff]
      %v398 = vld [vmem:[%s1 + $0x58] sm:$0xff]
      %v399 = vld [vmem:[%s1 + $0x60] sm:$0xff]
      %v400 = vld [vmem:[%s1 + $0x68] sm:$0xff]
      %v401 = vld [vmem:[%s1 + $0x70] sm:$0xff]
      %v402 = vld [vmem:[%s1 + $0x78] sm:$0xff]
      %v403 = vld [vmem:[%s1 + $0x80] sm:$0xff]
      %v404 = vld [vmem:[%s1 + $0x88] sm:$0xff]
      %v405 = vld [vmem:[%s1 + $0x90] sm:$0xff]
      %v406 = vld [vmem:[%s1 + $0x98] sm:$0xff]
      %v407 = vld [vmem:[%s1 + $0xa0] sm:$0xff]
      %v408 = vld [vmem:[%s1 + $0xa8] sm:$0xff]
      %v409 = vld [vmem:[%s1 + $0xb0] sm:$0xff]
      %v410 = vld [vmem:[%s1 + $0xb8] sm:$0xff]
      %v411 = vld [vmem:[%s1 + $0xc0] sm:$0xff]
      %v412 = vld [vmem:[%s1 + $0xc8] sm:$0xff]
      %v413 = vld [vmem:[%s1 + $0xd0] sm:$0xff]
      %v414 = vld [vmem:[%s1 + $0xd8] sm:$0xff]
      %v415 = vld [vmem:[%s1 + $0xe0] sm:$0xff]
      %v416 = vld [vmem:[%s1 + $0xe8] sm:$0xff]
      %v417 = vld [vmem:[%s1 + $0xf0] sm:$0xff]
      %v418 = vld [vmem:[%s1 + $0xf8] sm:$0xff]
      %v420 = vcombine.high %v386, %v386
      %422 = vmatprep.subr.mxu0 0.0
      %423 = vmatpush1.msra.mxu0 %v387
      %424 = vmatprep.subr.mxu0 0.0
      %425 = vmatpush1.msra.mxu0 %v388
      %426 = vmatprep.subr.mxu0 0.0
      %427 = vmatpush1.msra.mxu0 %v389
      %428 = vmatprep.subr.mxu0 0.0
      %429 = vmatpush1.msra.mxu0 %v390
      %430 = vmatprep.subr.mxu0 0.0
      %431 = vmatpush1.msra.mxu0 %v391
      %432 = vmatprep.subr.mxu0 0.0
      %433 = vmatpush1.msra.mxu0 %v392
      %434 = vmatprep.subr.mxu0 0.0
      %435 = vmatpush1.msra.mxu0 %v393
      %436 = vmatprep.subr.mxu0 0.0
      %437 = vmatpush1.msra.mxu0 %v394
      %438 = vmatprep.subr.mxu0 0.0
      %439 = vmatpush1.msra.mxu0 %v395
      %440 = vmatprep.subr.mxu0 0.0
      %441 = vmatpush1.msra.mxu0 %v396
      %442 = vmatprep.subr.mxu0 0.0
      %443 = vmatpush1.msra.mxu0 %v397
      %444 = vmatprep.subr.mxu0 0.0
      %445 = vmatpush1.msra.mxu0 %v398
      %446 = vmatprep.subr.mxu0 0.0
      %447 = vmatpush1.msra.mxu0 %v399
      %448 = vmatprep.subr.mxu0 0.0
      %449 = vmatpush1.msra.mxu0 %v400
      %450 = vmatprep.subr.mxu0 0.0
      %451 = vmatpush1.msra.mxu0 %v401
      %452 = vmatprep.subr.mxu0 0.0
      %453 = vmatpush1.msra.mxu0 %v402
      %454 = vmatprep.subr.mxu0 0.0
      %455 = vmatpush1.msra.mxu0 %v403
      %456 = vmatprep.subr.mxu0 0.0
      %457 = vmatpush1.msra.mxu0 %v404
      %458 = vmatprep.subr.mxu0 0.0
      %459 = vmatpush1.msra.mxu0 %v405
      %460 = vmatprep.subr.mxu0 0.0
      %461 = vmatpush1.msra.mxu0 %v406
      %462 = vmatprep.subr.mxu0 0.0
      %463 = vmatpush1.msra.mxu0 %v407
      %464 = vmatprep.subr.mxu0 0.0
      %465 = vmatpush1.msra.mxu0 %v408
      %466 = vmatprep.subr.mxu0 0.0
      %467 = vmatpush1.msra.mxu0 %v409
      %468 = vmatprep.subr.mxu0 0.0
      %469 = vmatpush1.msra.mxu0 %v410
      %470 = vmatprep.subr.mxu0 0.0
      %471 = vmatpush1.msra.mxu0 %v411
      %472 = vmatprep.subr.mxu0 0.0
      %473 = vmatpush1.msra.mxu0 %v412
      %474 = vmatprep.subr.mxu0 0.0
      %475 = vmatpush1.msra.mxu0 %v413
      %476 = vmatprep.subr.mxu0 0.0
      %477 = vmatpush1.msra.mxu0 %v414
      %478 = vmatprep.subr.mxu0 0.0
      %479 = vmatpush1.msra.mxu0 %v415
      %480 = vmatprep.subr.mxu0 0.0
      %481 = vmatpush1.msra.mxu0 %v416
      %482 = vmatprep.subr.mxu0 0.0
      %483 = vmatpush1.msra.mxu0 %v417
      %484 = vmatprep.subr.mxu0 0.0
      %485 = vmatpush1.msra.mxu0 %v418
      %486 = vmatprep.mubr.f32.mxu0 %v420
      %487 = vmatmul.mubr.f32.gmra.mrb[0].mxu0 %v386
      %v488 = vpop.f32.mrb[0].mxu0
      %v489 = vadd.f32 0.0, %v488
      %v490 = vpop.f32.mrb[0].mxu0
      %491 = vdwg.mxu0
      %s492 = scalar_lea.vmem %s1, 256
      %v493 = vld [vmem:[%s492] sm:$0xff]
      %v494 = vld [vmem:[%s492 + $0x8] sm:$0xff]
      %v495 = vld [vmem:[%s492 + $0x10] sm:$0xff]
      %v496 = vld [vmem:[%s492 + $0x18] sm:$0xff]
      %v497 = vld [vmem:[%s492 + $0x20] sm:$0xff]
      %v498 = vld [vmem:[%s492 + $0x28] sm:$0xff]
      %v499 = vld [vmem:[%s492 + $0x30] sm:$0xff]
      %v500 = vld [vmem:[%s492 + $0x38] sm:$0xff]
      %v501 = vld [vmem:[%s492 + $0x40] sm:$0xff]
      %v502 = vld [vmem:[%s492 + $0x48] sm:$0xff]
      %v503 = vld [vmem:[%s492 + $0x50] sm:$0xff]
      %v504 = vld [vmem:[%s492 + $0x58] sm:$0xff]
      %v505 = vld [vmem:[%s492 + $0x60] sm:$0xff]
      %v506 = vld [vmem:[%s492 + $0x68] sm:$0xff]
      %v507 = vld [vmem:[%s492 + $0x70] sm:$0xff]
      %v508 = vld [vmem:[%s492 + $0x78] sm:$0xff]
      %v509 = vld [vmem:[%s492 + $0x80] sm:$0xff]
      %v510 = vld [vmem:[%s492 + $0x88] sm:$0xff]
      %v511 = vld [vmem:[%s492 + $0x90] sm:$0xff]
      %v512 = vld [vmem:[%s492 + $0x98] sm:$0xff]
      %v513 = vld [vmem:[%s492 + $0xa0] sm:$0xff]
      %v514 = vld [vmem:[%s492 + $0xa8] sm:$0xff]
      %v515 = vld [vmem:[%s492 + $0xb0] sm:$0xff]
      %v516 = vld [vmem:[%s492 + $0xb8] sm:$0xff]
      %v517 = vld [vmem:[%s492 + $0xc0] sm:$0xff]
      %v518 = vld [vmem:[%s492 + $0xc8] sm:$0xff]
      %v519 = vld [vmem:[%s492 + $0xd0] sm:$0xff]
      %v520 = vld [vmem:[%s492 + $0xd8] sm:$0xff]
      %v521 = vld [vmem:[%s492 + $0xe0] sm:$0xff]
      %v522 = vld [vmem:[%s492 + $0xe8] sm:$0xff]
      %v523 = vld [vmem:[%s492 + $0xf0] sm:$0xff]
      %v524 = vld [vmem:[%s492 + $0xf8] sm:$0xff]
      %525 = vmatprep.subr.mxu0 0.0
      %526 = vmatpush1.msra.mxu0 %v493
      %527 = vmatprep.subr.mxu0 0.0
      %528 = vmatpush1.msra.mxu0 %v494
      %529 = vmatprep.subr.mxu0 0.0
      %530 = vmatpush1.msra.mxu0 %v495
      %531 = vmatprep.subr.mxu0 0.0
      %532 = vmatpush1.msra.mxu0 %v496
      %533 = vmatprep.subr.mxu0 0.0
      %534 = vmatpush1.msra.mxu0 %v497
      %535 = vmatprep.subr.mxu0 0.0
      %536 = vmatpush1.msra.mxu0 %v498
      %537 = vmatprep.subr.mxu0 0.0
      %538 = vmatpush1.msra.mxu0 %v499
      %539 = vmatprep.subr.mxu0 0.0
      %540 = vmatpush1.msra.mxu0 %v500
      %541 = vmatprep.subr.mxu0 0.0
      %542 = vmatpush1.msra.mxu0 %v501
      %543 = vmatprep.subr.mxu0 0.0
      %544 = vmatpush1.msra.mxu0 %v502
      %545 = vmatprep.subr.mxu0 0.0
      %546 = vmatpush1.msra.mxu0 %v503
      %547 = vmatprep.subr.mxu0 0.0
      %548 = vmatpush1.msra.mxu0 %v504
      %549 = vmatprep.subr.mxu0 0.0
      %550 = vmatpush1.msra.mxu0 %v505
      %551 = vmatprep.subr.mxu0 0.0
      %552 = vmatpush1.msra.mxu0 %v506
      %553 = vmatprep.subr.mxu0 0.0
      %554 = vmatpush1.msra.mxu0 %v507
      %555 = vmatprep.subr.mxu0 0.0
      %556 = vmatpush1.msra.mxu0 %v508
      %557 = vmatprep.subr.mxu0 0.0
      %558 = vmatpush1.msra.mxu0 %v509
      %559 = vmatprep.subr.mxu0 0.0
      %560 = vmatpush1.msra.mxu0 %v510
      %561 = vmatprep.subr.mxu0 0.0
      %562 = vmatpush1.msra.mxu0 %v511
      %563 = vmatprep.subr.mxu0 0.0
      %564 = vmatpush1.msra.mxu0 %v512
      %565 = vmatprep.subr.mxu0 0.0
      %566 = vmatpush1.msra.mxu0 %v513
      %567 = vmatprep.subr.mxu0 0.0
      %568 = vmatpush1.msra.mxu0 %v514
      %569 = vmatprep.subr.mxu0 0.0
      %570 = vmatpush1.msra.mxu0 %v515
      %571 = vmatprep.subr.mxu0 0.0
      %572 = vmatpush1.msra.mxu0 %v516
      %573 = vmatprep.subr.mxu0 0.0
      %574 = vmatpush1.msra.mxu0 %v517
      %575 = vmatprep.subr.mxu0 0.0
      %576 = vmatpush1.msra.mxu0 %v518
      %577 = vmatprep.subr.mxu0 0.0
      %578 = vmatpush1.msra.mxu0 %v519
      %579 = vmatprep.subr.mxu0 0.0
      %580 = vmatpush1.msra.mxu0 %v520
      %581 = vmatprep.subr.mxu0 0.0
      %582 = vmatpush1.msra.mxu0 %v521
      %583 = vmatprep.subr.mxu0 0.0
      %584 = vmatpush1.msra.mxu0 %v522
      %585 = vmatprep.subr.mxu0 0.0
      %586 = vmatpush1.msra.mxu0 %v523
      %587 = vmatprep.subr.mxu0 0.0
      %588 = vmatpush1.msra.mxu0 %v524
      %589 = vmatprep.mubr.f32.mxu0 %v420
      %590 = vmatmul.mubr.f32.gmra.mrb[0].mxu0 %v386
      %v591 = vpop.f32.mrb[0].mxu0
      %v592 = vadd.f32 0.0, %v591
      %v593 = vpop.f32.mrb[0].mxu0
      %594 = vdwg.mxu0
      %s595 = scalar_lea.vmem %s1, 512
      %v596 = vld [vmem:[%s595] sm:$0xff]
      %v597 = vld [vmem:[%s595 + $0x8] sm:$0xff]
      %v598 = vld [vmem:[%s595 + $0x10] sm:$0xff]
      %v599 = vld [vmem:[%s595 + $0x18] sm:$0xff]
      %v600 = vld [vmem:[%s595 + $0x20] sm:$0xff]
      %v601 = vld [vmem:[%s595 + $0x28] sm:$0xff]
      %v602 = vld [vmem:[%s595 + $0x30] sm:$0xff]
      %v603 = vld [vmem:[%s595 + $0x38] sm:$0xff]
      %v604 = vld [vmem:[%s595 + $0x40] sm:$0xff]
      %v605 = vld [vmem:[%s595 + $0x48] sm:$0xff]
      %v606 = vld [vmem:[%s595 + $0x50] sm:$0xff]
      %v607 = vld [vmem:[%s595 + $0x58] sm:$0xff]
      %v608 = vld [vmem:[%s595 + $0x60] sm:$0xff]
      %v609 = vld [vmem:[%s595 + $0x68] sm:$0xff]
      %v610 = vld [vmem:[%s595 + $0x70] sm:$0xff]
      %v611 = vld [vmem:[%s595 + $0x78] sm:$0xff]
      %v612 = vld [vmem:[%s595 + $0x80] sm:$0xff]
      %v613 = vld [vmem:[%s595 + $0x88] sm:$0xff]
      %v614 = vld [vmem:[%s595 + $0x90] sm:$0xff]
      %v615 = vld [vmem:[%s595 + $0x98] sm:$0xff]
      %v616 = vld [vmem:[%s595 + $0xa0] sm:$0xff]
      %v617 = vld [vmem:[%s595 + $0xa8] sm:$0xff]
      %v618 = vld [vmem:[%s595 + $0xb0] sm:$0xff]
      %v619 = vld [vmem:[%s595 + $0xb8] sm:$0xff]
      %v620 = vld [vmem:[%s595 + $0xc0] sm:$0xff]
      %v621 = vld [vmem:[%s595 + $0xc8] sm:$0xff]
      %v622 = vld [vmem:[%s595 + $0xd0] sm:$0xff]
      %v623 = vld [vmem:[%s595 + $0xd8] sm:$0xff]
      %v624 = vld [vmem:[%s595 + $0xe0] sm:$0xff]
      %v625 = vld [vmem:[%s595 + $0xe8] sm:$0xff]
      %v626 = vld [vmem:[%s595 + $0xf0] sm:$0xff]
      %v627 = vld [vmem:[%s595 + $0xf8] sm:$0xff]
      %628 = vmatprep.subr.mxu0 0.0
      %629 = vmatpush1.msra.mxu0 %v596
      %630 = vmatprep.subr.mxu0 0.0
      %631 = vmatpush1.msra.mxu0 %v597
      %632 = vmatprep.subr.mxu0 0.0
      %633 = vmatpush1.msra.mxu0 %v598
      %634 = vmatprep.subr.mxu0 0.0
      %635 = vmatpush1.msra.mxu0 %v599
      %636 = vmatprep.subr.mxu0 0.0
      %637 = vmatpush1.msra.mxu0 %v600
      %638 = vmatprep.subr.mxu0 0.0
      %639 = vmatpush1.msra.mxu0 %v601
      %640 = vmatprep.subr.mxu0 0.0
      %641 = vmatpush1.msra.mxu0 %v602
      %642 = vmatprep.subr.mxu0 0.0
      %643 = vmatpush1.msra.mxu0 %v603
      %644 = vmatprep.subr.mxu0 0.0
      %645 = vmatpush1.msra.mxu0 %v604
      %646 = vmatprep.subr.mxu0 0.0
      %647 = vmatpush1.msra.mxu0 %v605
      %648 = vmatprep.subr.mxu0 0.0
      %649 = vmatpush1.msra.mxu0 %v606
      %650 = vmatprep.subr.mxu0 0.0
      %651 = vmatpush1.msra.mxu0 %v607
      %652 = vmatprep.subr.mxu0 0.0
      %653 = vmatpush1.msra.mxu0 %v608
      %654 = vmatprep.subr.mxu0 0.0
      %655 = vmatpush1.msra.mxu0 %v609
      %656 = vmatprep.subr.mxu0 0.0
      %657 = vmatpush1.msra.mxu0 %v610
      %658 = vmatprep.subr.mxu0 0.0
      %659 = vmatpush1.msra.mxu0 %v611
      %660 = vmatprep.subr.mxu0 0.0
      %661 = vmatpush1.msra.mxu0 %v612
      %662 = vmatprep.subr.mxu0 0.0
      %663 = vmatpush1.msra.mxu0 %v613
      %664 = vmatprep.subr.mxu0 0.0
      %665 = vmatpush1.msra.mxu0 %v614
      %666 = vmatprep.subr.mxu0 0.0
      %667 = vmatpush1.msra.mxu0 %v615
      %668 = vmatprep.subr.mxu0 0.0
      %669 = vmatpush1.msra.mxu0 %v616
      %670 = vmatprep.subr.mxu0 0.0
      %671 = vmatpush1.msra.mxu0 %v617
      %672 = vmatprep.subr.mxu0 0.0
      %673 = vmatpush1.msra.mxu0 %v618
      %674 = vmatprep.subr.mxu0 0.0
      %675 = vmatpush1.msra.mxu0 %v619
      %676 = vmatprep.subr.mxu0 0.0
      %677 = vmatpush1.msra.mxu0 %v620
      %678 = vmatprep.subr.mxu0 0.0
      %679 = vmatpush1.msra.mxu0 %v621
      %680 = vmatprep.subr.mxu0 0.0
      %681 = vmatpush1.msra.mxu0 %v622
      %682 = vmatprep.subr.mxu0 0.0
      %683 = vmatpush1.msra.mxu0 %v623
      %684 = vmatprep.subr.mxu0 0.0
      %685 = vmatpush1.msra.mxu0 %v624
      %686 = vmatprep.subr.mxu0 0.0
      %687 = vmatpush1.msra.mxu0 %v625
      %688 = vmatprep.subr.mxu0 0.0
      %689 = vmatpush1.msra.mxu0 %v626
      %690 = vmatprep.subr.mxu0 0.0
      %691 = vmatpush1.msra.mxu0 %v627
      %692 = vmatprep.mubr.f32.mxu0 %v420
      %693 = vmatmul.mubr.f32.gmra.mrb[0].mxu0 %v386
      %v694 = vpop.f32.mrb[0].mxu0
      %v695 = vadd.f32 0.0, %v694
      %v696 = vpop.f32.mrb[0].mxu0
      %697 = vdwg.mxu0
      %s698 = scalar_lea.vmem %s1, 768
      %v699 = vld [vmem:[%s698] sm:$0xff]
      %v700 = vld [vmem:[%s698 + $0x8] sm:$0xff]
      %v701 = vld [vmem:[%s698 + $0x10] sm:$0xff]
      %v702 = vld [vmem:[%s698 + $0x18] sm:$0xff]
      %v703 = vld [vmem:[%s698 + $0x20] sm:$0xff]
      %v704 = vld [vmem:[%s698 + $0x28] sm:$0xff]
      %v705 = vld [vmem:[%s698 + $0x30] sm:$0xff]
      %v706 = vld [vmem:[%s698 + $0x38] sm:$0xff]
      %v707 = vld [vmem:[%s698 + $0x40] sm:$0xff]
      %v708 = vld [vmem:[%s698 + $0x48] sm:$0xff]
      %v709 = vld [vmem:[%s698 + $0x50] sm:$0xff]
      %v710 = vld [vmem:[%s698 + $0x58] sm:$0xff]
      %v711 = vld [vmem:[%s698 + $0x60] sm:$0xff]
      %v712 = vld [vmem:[%s698 + $0x68] sm:$0xff]
      %v713 = vld [vmem:[%s698 + $0x70] sm:$0xff]
      %v714 = vld [vmem:[%s698 + $0x78] sm:$0xff]
      %v715 = vld [vmem:[%s698 + $0x80] sm:$0xff]
      %v716 = vld [vmem:[%s698 + $0x88] sm:$0xff]
      %v717 = vld [vmem:[%s698 + $0x90] sm:$0xff]
      %v718 = vld [vmem:[%s698 + $0x98] sm:$0xff]
      %v719 = vld [vmem:[%s698 + $0xa0] sm:$0xff]
      %v720 = vld [vmem:[%s698 + $0xa8] sm:$0xff]
      %v721 = vld [vmem:[%s698 + $0xb0] sm:$0xff]
      %v722 = vld [vmem:[%s698 + $0xb8] sm:$0xff]
      %v723 = vld [vmem:[%s698 + $0xc0] sm:$0xff]
      %v724 = vld [vmem:[%s698 + $0xc8] sm:$0xff]
      %v725 = vld [vmem:[%s698 + $0xd0] sm:$0xff]
      %v726 = vld [vmem:[%s698 + $0xd8] sm:$0xff]
      %v727 = vld [vmem:[%s698 + $0xe0] sm:$0xff]
      %v728 = vld [vmem:[%s698 + $0xe8] sm:$0xff]
      %v729 = vld [vmem:[%s698 + $0xf0] sm:$0xff]
      %v730 = vld [vmem:[%s698 + $0xf8] sm:$0xff]
      %731 = vmatprep.subr.mxu0 0.0
      %732 = vmatpush1.msra.mxu0 %v699
      %733 = vmatprep.subr.mxu0 0.0
      %734 = vmatpush1.msra.mxu0 %v700
      %735 = vmatprep.subr.mxu0 0.0
      %736 = vmatpush1.msra.mxu0 %v701
      %737 = vmatprep.subr.mxu0 0.0
      %738 = vmatpush1.msra.mxu0 %v702
      %739 = vmatprep.subr.mxu0 0.0
      %740 = vmatpush1.msra.mxu0 %v703
      %741 = vmatprep.subr.mxu0 0.0
      %742 = vmatpush1.msra.mxu0 %v704
      %743 = vmatprep.subr.mxu0 0.0
      %744 = vmatpush1.msra.mxu0 %v705
      %745 = vmatprep.subr.mxu0 0.0
      %746 = vmatpush1.msra.mxu0 %v706
      %747 = vmatprep.subr.mxu0 0.0
      %748 = vmatpush1.msra.mxu0 %v707
      %749 = vmatprep.subr.mxu0 0.0
      %750 = vmatpush1.msra.mxu0 %v708
      %751 = vmatprep.subr.mxu0 0.0
      %752 = vmatpush1.msra.mxu0 %v709
      %753 = vmatprep.subr.mxu0 0.0
      %754 = vmatpush1.msra.mxu0 %v710
      %755 = vmatprep.subr.mxu0 0.0
      %756 = vmatpush1.msra.mxu0 %v711
      %757 = vmatprep.subr.mxu0 0.0
      %758 = vmatpush1.msra.mxu0 %v712
      %759 = vmatprep.subr.mxu0 0.0
      %760 = vmatpush1.msra.mxu0 %v713
      %761 = vmatprep.subr.mxu0 0.0
      %762 = vmatpush1.msra.mxu0 %v714
      %763 = vmatprep.subr.mxu0 0.0
      %764 = vmatpush1.msra.mxu0 %v715
      %765 = vmatprep.subr.mxu0 0.0
      %766 = vmatpush1.msra.mxu0 %v716
      %767 = vmatprep.subr.mxu0 0.0
      %768 = vmatpush1.msra.mxu0 %v717
      %769 = vmatprep.subr.mxu0 0.0
      %770 = vmatpush1.msra.mxu0 %v718
      %771 = vmatprep.subr.mxu0 0.0
      %772 = vmatpush1.msra.mxu0 %v719
      %773 = vmatprep.subr.mxu0 0.0
      %774 = vmatpush1.msra.mxu0 %v720
      %775 = vmatprep.subr.mxu0 0.0
      %776 = vmatpush1.msra.mxu0 %v721
      %777 = vmatprep.subr.mxu0 0.0
      %778 = vmatpush1.msra.mxu0 %v722
      %779 = vmatprep.subr.mxu0 0.0
      %780 = vmatpush1.msra.mxu0 %v723
      %781 = vmatprep.subr.mxu0 0.0
      %782 = vmatpush1.msra.mxu0 %v724
      %783 = vmatprep.subr.mxu0 0.0
      %784 = vmatpush1.msra.mxu0 %v725
      %785 = vmatprep.subr.mxu0 0.0
      %786 = vmatpush1.msra.mxu0 %v726
      %787 = vmatprep.subr.mxu0 0.0
      %788 = vmatpush1.msra.mxu0 %v727
      %789 = vmatprep.subr.mxu0 0.0
      %790 = vmatpush1.msra.mxu0 %v728
      %791 = vmatprep.subr.mxu0 0.0
      %792 = vmatpush1.msra.mxu0 %v729
      %793 = vmatprep.subr.mxu0 0.0
      %794 = vmatpush1.msra.mxu0 %v730
      %795 = vmatprep.mubr.f32.mxu0 %v420
      %796 = vmatmul.mubr.f32.gmra.mrb[0].mxu0 %v386
      %v797 = vpop.f32.mrb[0].mxu0
      %v798 = vadd.f32 0.0, %v797
      %v799 = vpop.f32.mrb[0].mxu0
      %800 = vdwg.mxu0
      %v801 = vmax.f32 %v489, %v592
      %v802 = vmax.f32 %v695, %v798
      %v803 = vmax.f32 %v801, %v802
      %v804 = vld [vmem:[%s3] sm:$0xf]
      %806 = vset.pattern.permute.xlu0 0
      %807 = vperm.xlu0 %806, %v804
      %v808 = vpop.permute.xlu0 %807
      %v810 = vmul.f32 %v803, %v808
      %v811 = vld [vmem:[%s4] sm:$0xf]
      %813 = vset.pattern.permute.xlu0 0
      %814 = vperm.xlu0 %813, %v811
      %v815 = vpop.permute.xlu0 %814
      %v817 = vadd.f32 %v810, %v815
      %v818 = vadd.f32 %v489, %v592
      %v819 = vadd.f32 %v695, %v798
      %v820 = vadd.f32 %v818, %v819
      %v821 = vld [vmem:[%s9] sm:$0xf]
      %v822 = vpack.c.bf16 %v820, %v820
      %v823 = vld [vmem:[%s10] sm:$0xff]
      %825 = vset.pattern.permute.xlu0 0
      %826 = vperm.xlu0 %825, %v823
      %v827 = vpop.permute.xlu0 %826
      %vm829 = vcmask 31744
      %v831 = vsel %vm829, %v821, 0
      %vm833 = vcmask 1041408
      %v835 = vsel %vm833, %v822, 0
      %837 = vmatprep.subr.bf16.mxu0 0
      %838 = vmatpush1.bf16.msra.mxu0 %v835
      %839 = vmatprep.subr.bf16.mxu0 0
      %840 = vmatpush1.bf16.msra.mxu0 0
      %841 = vmatprep.subr.bf16.mxu0 0
      %842 = vmatpush1.bf16.msra.mxu0 0
      %843 = vmatprep.subr.bf16.mxu0 0
      %844 = vmatpush1.bf16.msra.mxu0 0
      %845 = vmatprep.subr.bf16.mxu0 0
      %846 = vmatpush1.bf16.msra.mxu0 0
      %847 = vmatprep.subr.bf16.mxu0 0
      %848 = vmatpush1.bf16.msra.mxu0 0
      %849 = vmatprep.subr.bf16.mxu0 0
      %850 = vmatpush1.bf16.msra.mxu0 0
      %851 = vmatprep.subr.bf16.mxu0 0
      %852 = vmatpush1.bf16.msra.mxu0 0
      %853 = vmatprep.subr.bf16.mxu0 0
      %854 = vmatpush1.bf16.msra.mxu0 0
      %855 = vmatprep.subr.bf16.mxu0 0
      %856 = vmatpush1.bf16.msra.mxu0 0
      %857 = vmatprep.subr.bf16.mxu0 0
      %858 = vmatpush1.bf16.msra.mxu0 0
      %859 = vmatprep.subr.bf16.mxu0 0
      %860 = vmatpush1.bf16.msra.mxu0 0
      %861 = vmatprep.subr.bf16.mxu0 0
      %862 = vmatpush1.bf16.msra.mxu0 0
      %863 = vmatprep.subr.bf16.mxu0 0
      %864 = vmatpush1.bf16.msra.mxu0 0
      %865 = vmatprep.subr.bf16.mxu0 0
      %866 = vmatpush1.bf16.msra.mxu0 0
      %867 = vmatprep.subr.bf16.mxu0 0
      %868 = vmatpush1.bf16.msra.mxu0 0
      %869 = vmatprep.mubr.bf16.mxu0 0
      %870 = vmatmul.mubr.bf16.gmra.mrb[0].mxu0 %v831
      %v871 = vpop.f32.mrb[0].mxu0
      %v872 = vadd.f32 %v827, %v871
      %v873 = vpop.f32.mrb[0].mxu0
      %v874 = vpop.f32.mrb[0].mxu0
      %v875 = vpop.f32.mrb[0].mxu0
      %876 = vdwg.mxu0
      %878 = vrot.lane.b32.xlu0 %v817, 73
      %v879 = vpop.permute.xlu0 %878
      %881 = vrot.lane.b32.xlu0 %v817, 9
      %v882 = vpop.permute.xlu0 %881
      %vm884 = vcmask 72704
      %v885 = vsel %vm884, %v879, %v882
      %v886 = vld [vmem:[%s2] sm:$0x1]
      %v887 = vlaneseq
      %v888 = vshrl.u32 %v887, 7
      %v889 = vsub.s32 0, %v888
      %v890 = vrot.slane %v886, %v889
      %v891 = vmul.f32 %v885, %v890
      %vm892 = vcmask 519168
      %893 = vst.msk [vmem:[#allocation2] sm:$0xf] %vm892, %v891
      %894 = vrot.lane.b32.xlu0 %v817, 72
      %v895 = vpop.permute.xlu0 %894
      %897 = vrot.lane.b32.xlu0 %v817, 8
      %v898 = vpop.permute.xlu0 %897
      %vm900 = vcmask 64512
      %v901 = vsel %vm900, %v895, %v898
      %v902 = vld [vmem:[%s2 + $0x1] sm:$0x1]
      %v903 = vlaneseq
      %v904 = vshrl.u32 %v903, 7
      %v905 = vsub.s32 0, %v904
      %v906 = vrot.slane %v902, %v905
      %v907 = vmul.f32 %v901, %v906
      %908 = vst.msk [vmem:[#allocation2 + $0x4] sm:$0xf] %vm892, %v907
      %909 = vrot.lane.b32.xlu0 %v817, 71
      %v910 = vpop.permute.xlu0 %909
      %912 = vrot.lane.b32.xlu0 %v817, 7
      %v913 = vpop.permute.xlu0 %912
      %vm915 = vcmask 56320
      %v916 = vsel %vm915, %v910, %v913
      %v917 = vld [vmem:[%s2 + $0x2] sm:$0x1]
      %v918 = vlaneseq
      %v919 = vshrl.u32 %v918, 7
      %v920 = vsub.s32 0, %v919
      %v921 = vrot.slane %v917, %v920
      %v922 = vmul.f32 %v916, %v921
      %923 = vst.msk [vmem:[#allocation2 + $0x8] sm:$0xf] %vm892, %v922
      %924 = vrot.lane.b32.xlu0 %v817, 65
      %v925 = vpop.permute.xlu0 %924
      %927 = vrot.lane.b32.xlu0 %v817, 1
      %v928 = vpop.permute.xlu0 %927
      %vm930 = vcmask 7168
      %v931 = vsel %vm930, %v925, %v928
      %v932 = vld [vmem:[%s2 + $0x3] sm:$0x1]
      %v933 = vlaneseq
      %v934 = vshrl.u32 %v933, 7
      %v935 = vsub.s32 0, %v934
      %v936 = vrot.slane %v932, %v935
      %v937 = vmul.f32 %v931, %v936
      %938 = vst.msk [vmem:[#allocation2 + $0xc] sm:$0xf] %vm892, %v937
      %939 = vst.msk [vmem:[#allocation2 + $0x10] sm:$0xf] %vm892, %v817
      %940 = vrot.lane.b32.xlu0 %v817, 127
      %v941 = vpop.permute.xlu0 %940
      %943 = vrot.lane.b32.xlu0 %v817, 63
      %v944 = vpop.permute.xlu0 %943
      %vm946 = vcmask 515072
      %v947 = vsel %vm946, %v941, %v944
      %v948 = vld [vmem:[%s2 + $0x5] sm:$0x1]
      %v949 = vlaneseq
      %v950 = vshrl.u32 %v949, 7
      %v951 = vsub.s32 0, %v950
      %v952 = vrot.slane %v948, %v951
      %v953 = vmul.f32 %v947, %v952
      %954 = vst.msk [vmem:[#allocation2 + $0x14] sm:$0xf] %vm892, %v953
      %955 = vrot.lane.b32.xlu0 %v817, 121
      %v956 = vpop.permute.xlu0 %955
      %958 = vrot.lane.b32.xlu0 %v817, 57
      %v959 = vpop.permute.xlu0 %958
      %vm961 = vcmask 465920
      %v962 = vsel %vm961, %v956, %v959
      %v963 = vld [vmem:[%s2 + $0x6] sm:$0x1]
      %v964 = vlaneseq
      %v965 = vshrl.u32 %v964, 7
      %v966 = vsub.s32 0, %v965
      %v967 = vrot.slane %v963, %v966
      %v968 = vmul.f32 %v962, %v967
      %969 = vst.msk [vmem:[#allocation2 + $0x18] sm:$0xf] %vm892, %v968
      %970 = vrot.lane.b32.xlu0 %v817, 120
      %v971 = vpop.permute.xlu0 %970
      %973 = vrot.lane.b32.xlu0 %v817, 56
      %v974 = vpop.permute.xlu0 %973
      %vm976 = vcmask 457728
      %v977 = vsel %vm976, %v971, %v974
      %v978 = vld [vmem:[%s2 + $0x7] sm:$0x1]
      %v979 = vlaneseq
      %v980 = vshrl.u32 %v979, 7
      %v981 = vsub.s32 0, %v980
      %v982 = vrot.slane %v978, %v981
      %v983 = vmul.f32 %v977, %v982
      %984 = vst.msk [vmem:[#allocation2 + $0x1c] sm:$0xf] %vm892, %v983
      %985 = vrot.lane.b32.xlu0 %v817, 119
      %v986 = vpop.permute.xlu0 %985
      %988 = vrot.lane.b32.xlu0 %v817, 55
      %v989 = vpop.permute.xlu0 %988
      %vm991 = vcmask 449536
      %v992 = vsel %vm991, %v986, %v989
      %v993 = vld [vmem:[%s2 + $0x8] sm:$0x1]
      %v994 = vlaneseq
      %v995 = vshrl.u32 %v994, 7
      %v996 = vsub.s32 0, %v995
      %v997 = vrot.slane %v993, %v996
      %v998 = vmul.f32 %v992, %v997
      %999 = vst.msk [vmem:[#allocation2 + $0x20] sm:$0xf] %vm892, %v998
      %v1000 = vld [vmem:[#allocation2] sm:$0xff]
      %v1001 = vld [vmem:[#allocation2 + $0x8] sm:$0xff]
      %v1002 = vld [vmem:[#allocation2 + $0x10] sm:$0xff]
      %v1003 = vld [vmem:[#allocation2 + $0x18] sm:$0xff]
      %v1004 = vld [vmem:[#allocation2 + $0x20] sm:$0xf]
      %v1005 = vld [vmem:[%s5] sm:$0xf]
      %v1006 = vpack.c.bf16 %v1001, %v1000
      %v1007 = vpack.c.bf16 %v1003, %v1002
      %v1008 = vpack.c.bf16 %v1004, %v1004
      %v1009 = vld [vmem:[%s6] sm:$0xff]
      %1011 = vset.pattern.permute.xlu0 0
      %1012 = vperm.xlu0 %1011, %v1009
      %v1013 = vpop.permute.xlu0 %1012
      %vm1015 = vcmask 293888
      %v1017 = vsel %vm1015, %v1005, 0
      %v1020 = vsel %vm833, %v1008, 0
      %1022 = vmatprep.subr.bf16.mxu0 0
      %1023 = vmatpush1.bf16.msra.mxu0 %v1006
      %1024 = vmatprep.subr.bf16.mxu0 0
      %1025 = vmatpush1.bf16.msra.mxu0 %v1007
      %1026 = vmatprep.subr.bf16.mxu0 0
      %1027 = vmatpush1.bf16.msra.mxu0 %v1020
      %1028 = vmatprep.subr.bf16.mxu0 0
      %1029 = vmatpush1.bf16.msra.mxu0 0
      %1030 = vmatprep.subr.bf16.mxu0 0
      %1031 = vmatpush1.bf16.msra.mxu0 0
      %1032 = vmatprep.subr.bf16.mxu0 0
      %1033 = vmatpush1.bf16.msra.mxu0 0
      %1034 = vmatprep.subr.bf16.mxu0 0
      %1035 = vmatpush1.bf16.msra.mxu0 0
      %1036 = vmatprep.subr.bf16.mxu0 0
      %1037 = vmatpush1.bf16.msra.mxu0 0
      %1038 = vmatprep.subr.bf16.mxu0 0
      %1039 = vmatpush1.bf16.msra.mxu0 0
      %1040 = vmatprep.subr.bf16.mxu0 0
      %1041 = vmatpush1.bf16.msra.mxu0 0
      %1042 = vmatprep.subr.bf16.mxu0 0
      %1043 = vmatpush1.bf16.msra.mxu0 0
      %1044 = vmatprep.subr.bf16.mxu0 0
      %1045 = vmatpush1.bf16.msra.mxu0 0
      %1046 = vmatprep.subr.bf16.mxu0 0
      %1047 = vmatpush1.bf16.msra.mxu0 0
      %1048 = vmatprep.subr.bf16.mxu0 0
      %1049 = vmatpush1.bf16.msra.mxu0 0
      %1050 = vmatprep.subr.bf16.mxu0 0
      %1051 = vmatpush1.bf16.msra.mxu0 0
      %1052 = vmatprep.subr.bf16.mxu0 0
      %1053 = vmatpush1.bf16.msra.mxu0 0
      %1054 = vmatprep.mubr.bf16.mxu0 0
      %1055 = vmatmul.mubr.bf16.gmra.mrb[0].mxu0 %v1017
      %v1056 = vpop.f32.mrb[0].mxu0
      %v1057 = vadd.f32 %v1013, %v1056
      %v1058 = vpop.f32.mrb[0].mxu0
      %v1059 = vpop.f32.mrb[0].mxu0
      %v1060 = vpop.f32.mrb[0].mxu0
      %1061 = vdwg.mxu0
      %v1062 = vtanh.pop %v1057
      %v1063 = vmul.f32 %v1062, 0.5
      %v1064 = vadd.f32 %v1063, 0.5
      %1066 = vrot.lane.b32.xlu0 %v1064, 73
      %v1067 = vpop.permute.xlu0 %1066
      %1069 = vrot.lane.b32.xlu0 %v1064, 9
      %v1070 = vpop.permute.xlu0 %1069
      %v1072 = vsel %vm884, %v1067, %v1070
      %v1073 = vld [vmem:[%s2] sm:$0x1]
      %v1074 = vlaneseq
      %v1075 = vshrl.u32 %v1074, 7
      %v1076 = vsub.s32 0, %v1075
      %v1077 = vrot.slane %v1073, %v1076
      %v1078 = vmul.f32 %v1072, %v1077
      %vm1079 = vcmask 523264
      %1080 = vst.msk [vmem:[#allocation3] sm:$0xff] %vm1079, %v1078
      %1081 = vrot.lane.b32.xlu0 %v1064, 72
      %v1082 = vpop.permute.xlu0 %1081
      %1084 = vrot.lane.b32.xlu0 %v1064, 8
      %v1085 = vpop.permute.xlu0 %1084
      %v1087 = vsel %vm900, %v1082, %v1085
      %v1088 = vld [vmem:[%s2 + $0x1] sm:$0x1]
      %v1089 = vlaneseq
      %v1090 = vshrl.u32 %v1089, 7
      %v1091 = vsub.s32 0, %v1090
      %v1092 = vrot.slane %v1088, %v1091
      %v1093 = vmul.f32 %v1087, %v1092
      %1094 = vst.msk [vmem:[#allocation3 + $0x8] sm:$0xff] %vm1079, %v1093
      %1095 = vrot.lane.b32.xlu0 %v1064, 71
      %v1096 = vpop.permute.xlu0 %1095
      %1098 = vrot.lane.b32.xlu0 %v1064, 7
      %v1099 = vpop.permute.xlu0 %1098
      %v1101 = vsel %vm915, %v1096, %v1099
      %v1102 = vld [vmem:[%s2 + $0x2] sm:$0x1]
      %v1103 = vlaneseq
      %v1104 = vshrl.u32 %v1103, 7
      %v1105 = vsub.s32 0, %v1104
      %v1106 = vrot.slane %v1102, %v1105
      %v1107 = vmul.f32 %v1101, %v1106
      %1108 = vst.msk [vmem:[#allocation3 + $0x10] sm:$0xff] %vm1079, %v1107
      %1109 = vrot.lane.b32.xlu0 %v1064, 65
      %v1110 = vpop.permute.xlu0 %1109
      %1112 = vrot.lane.b32.xlu0 %v1064, 1
      %v1113 = vpop.permute.xlu0 %1112
      %v1115 = vsel %vm930, %v1110, %v1113
      %v1116 = vld [vmem:[%s2 + $0x3] sm:$0x1]
      %v1117 = vlaneseq
      %v1118 = vshrl.u32 %v1117, 7
      %v1119 = vsub.s32 0, %v1118
      %v1120 = vrot.slane %v1116, %v1119
      %v1121 = vmul.f32 %v1115, %v1120
      %1122 = vst.msk [vmem:[#allocation3 + $0x18] sm:$0xff] %vm1079, %v1121
      %1123 = vst.msk [vmem:[#allocation3 + $0x20] sm:$0xff] %vm1079, %v1064
      %1124 = vrot.lane.b32.xlu0 %v1064, 127
      %v1125 = vpop.permute.xlu0 %1124
      %1127 = vrot.lane.b32.xlu0 %v1064, 63
      %v1128 = vpop.permute.xlu0 %1127
      %v1130 = vsel %vm946, %v1125, %v1128
      %v1131 = vld [vmem:[%s2 + $0x5] sm:$0x1]
      %v1132 = vlaneseq
      %v1133 = vshrl.u32 %v1132, 7
      %v1134 = vsub.s32 0, %v1133
      %v1135 = vrot.slane %v1131, %v1134
      %v1136 = vmul.f32 %v1130, %v1135
      %1137 = vst.msk [vmem:[#allocation3 + $0x28] sm:$0xff] %vm1079, %v1136
      %1138 = vrot.lane.b32.xlu0 %v1064, 121
      %v1139 = vpop.permute.xlu0 %1138
      %1141 = vrot.lane.b32.xlu0 %v1064, 57
      %v1142 = vpop.permute.xlu0 %1141
      %v1144 = vsel %vm961, %v1139, %v1142
      %v1145 = vld [vmem:[%s2 + $0x6] sm:$0x1]
      %v1146 = vlaneseq
      %v1147 = vshrl.u32 %v1146, 7
      %v1148 = vsub.s32 0, %v1147
      %v1149 = vrot.slane %v1145, %v1148
      %v1150 = vmul.f32 %v1144, %v1149
      %1151 = vst.msk [vmem:[#allocation3 + $0x30] sm:$0xff] %vm1079, %v1150
      %1152 = vrot.lane.b32.xlu0 %v1064, 120
      %v1153 = vpop.permute.xlu0 %1152
      %1155 = vrot.lane.b32.xlu0 %v1064, 56
      %v1156 = vpop.permute.xlu0 %1155
      %v1158 = vsel %vm976, %v1153, %v1156
      %v1159 = vld [vmem:[%s2 + $0x7] sm:$0x1]
      %v1160 = vlaneseq
      %v1161 = vshrl.u32 %v1160, 7
      %v1162 = vsub.s32 0, %v1161
      %v1163 = vrot.slane %v1159, %v1162
      %v1164 = vmul.f32 %v1158, %v1163
      %1165 = vst.msk [vmem:[#allocation3 + $0x38] sm:$0xff] %vm1079, %v1164
      %1166 = vrot.lane.b32.xlu0 %v1064, 119
      %v1167 = vpop.permute.xlu0 %1166
      %1169 = vrot.lane.b32.xlu0 %v1064, 55
      %v1170 = vpop.permute.xlu0 %1169
      %v1172 = vsel %vm991, %v1167, %v1170
      %v1173 = vld [vmem:[%s2 + $0x8] sm:$0x1]
      %v1174 = vlaneseq
      %v1175 = vshrl.u32 %v1174, 7
      %v1176 = vsub.s32 0, %v1175
      %v1177 = vrot.slane %v1173, %v1176
      %v1178 = vmul.f32 %v1172, %v1177
      %1179 = vst.msk [vmem:[#allocation3 + $0x40] sm:$0xff] %vm1079, %v1178
      %v1180 = vld [vmem:[#allocation3] sm:$0xff]
      %v1181 = vld [vmem:[#allocation3 + $0x8] sm:$0xff]
      %v1182 = vld [vmem:[#allocation3 + $0x10] sm:$0xff]
      %v1183 = vld [vmem:[#allocation3 + $0x18] sm:$0xff]
      %v1184 = vld [vmem:[#allocation3 + $0x20] sm:$0xff]
      %v1185 = vld [vmem:[#allocation3 + $0x28] sm:$0xff]
      %v1186 = vld [vmem:[#allocation3 + $0x30] sm:$0xff]
      %v1187 = vld [vmem:[#allocation3 + $0x38] sm:$0xff]
      %v1188 = vld [vmem:[#allocation3 + $0x40] sm:$0xff]
      %v1189 = vld [vmem:[%s7] sm:$0xf]
      %v1190 = vpack.c.bf16 %v1181, %v1180
      %v1191 = vpack.c.bf16 %v1183, %v1182
      %v1192 = vpack.c.bf16 %v1185, %v1184
      %v1193 = vpack.c.bf16 %v1187, %v1186
      %v1194 = vpack.c.bf16 %v1188, %v1188
      %v1195 = vld [vmem:[%s8] sm:$0xff]
      %1197 = vset.pattern.permute.xlu0 0
      %1198 = vperm.xlu0 %1197, %v1195
      %v1199 = vpop.permute.xlu0 %1198
      %vm1201 = vcmask 588800
      %v1203 = vsel %vm1201, %v1189, 0
      %vm1205 = vcmask 1043456
      %v1207 = vsel %vm1205, %v1194, 0
      %1209 = vmatprep.subr.bf16.mxu0 0
      %1210 = vmatpush1.bf16.msra.mxu0 %v1190
      %1211 = vmatprep.subr.bf16.mxu0 0
      %1212 = vmatpush1.bf16.msra.mxu0 %v1191
      %1213 = vmatprep.subr.bf16.mxu0 0
      %1214 = vmatpush1.bf16.msra.mxu0 %v1192
      %1215 = vmatprep.subr.bf16.mxu0 0
      %1216 = vmatpush1.bf16.msra.mxu0 %v1193
      %1217 = vmatprep.subr.bf16.mxu0 0
      %1218 = vmatpush1.bf16.msra.mxu0 %v1207
      %1219 = vmatprep.subr.bf16.mxu0 0
      %1220 = vmatpush1.bf16.msra.mxu0 0
      %1221 = vmatprep.subr.bf16.mxu0 0
      %1222 = vmatpush1.bf16.msra.mxu0 0
      %1223 = vmatprep.subr.bf16.mxu0 0
      %1224 = vmatpush1.bf16.msra.mxu0 0
      %1225 = vmatprep.subr.bf16.mxu0 0
      %1226 = vmatpush1.bf16.msra.mxu0 0
      %1227 = vmatprep.subr.bf16.mxu0 0
      %1228 = vmatpush1.bf16.msra.mxu0 0
      %1229 = vmatprep.subr.bf16.mxu0 0
      %1230 = vmatpush1.bf16.msra.mxu0 0
      %1231 = vmatprep.subr.bf16.mxu0 0
      %1232 = vmatpush1.bf16.msra.mxu0 0
      %1233 = vmatprep.subr.bf16.mxu0 0
      %1234 = vmatpush1.bf16.msra.mxu0 0
      %1235 = vmatprep.subr.bf16.mxu0 0
      %1236 = vmatpush1.bf16.msra.mxu0 0
      %1237 = vmatprep.subr.bf16.mxu0 0
      %1238 = vmatpush1.bf16.msra.mxu0 0
      %1239 = vmatprep.subr.bf16.mxu0 0
      %1240 = vmatpush1.bf16.msra.mxu0 0
      %1241 = vmatprep.mubr.bf16.mxu0 0
      %1242 = vmatmul.mubr.bf16.gmra.mrb[0].mxu0 %v1203
      %v1243 = vpop.f32.mrb[0].mxu0
      %v1244 = vadd.f32 %v1199, %v1243
      %v1245 = vpop.f32.mrb[0].mxu0
      %v1246 = vpop.f32.mrb[0].mxu0
      %v1247 = vpop.f32.mrb[0].mxu0
      %1248 = vdwg.mxu0
      %v1249 = vadd.f32 %v1244, %v872
      %v1250 = vtanh.pop %v1249
      %v1251 = vmul.f32 %v1250, 0.5
      %v1252 = vadd.f32 %v1251, 0.5
      %1253 = vst.msk [vmem:[%s384] sm:$0xff] %vm1079, %v1252
      %p1254 = scmp.lt.s32.totalorder %s22, 1
      %s1255 = scalar_select %p1254, %s22, 1
      %s1256 = smul.addr %s1255, 8
      %s1257 = scalar_lea.vmem %s11, %s1256
      // Predicated region
      $region65: #{downsampling_block.1} parent=63 // pred_check
        %p1258 = pneg %p276
      $region66: #{downsampling_block.1} parent=63 // pred_check_branch
        %1260 = sbr.rel (%p1258) target = $region68
      $region67: #{downsampling_block.1} parent=63 // pred_region
        _
      $region68: #{downsampling_block.1} parent=63 // pred_fallthru
        _
    $region64: #{downsampling_block.1} parent=5 // pred_fallthru
      _
    %p1261 = scmp.le.s32.totalorder 2, %s17
    // Predicated region
    $region69: #{downsampling_block.1} parent=5 // pred_check
      %p1262 = pneg %p1261
    $region70: #{downsampling_block.1} parent=5 // pred_check_branch
      %1264 = sbr.rel (%p1262) target = $region72
    $region71: #{downsampling_block.1} parent=5 // pred_region
      %s1265 = ssub.s32 %s17, 2
      // Predicated region
      $region73: #{downsampling_block.1} parent=71 // pred_check
        %p1266 = pneg %p282
      $region74: #{downsampling_block.1} parent=71 // pred_check_branch
        %1268 = sbr.rel (%p1266) target = $region76
      $region75: #{downsampling_block.1} parent=71 // pred_region
        %p1269 = scmp.lt.s32.totalorder %s23, 1
        %s1270 = scalar_select %p1269, %s23, 1
        %s1271 = smul.addr %s1270, 8
        %s1272 = scalar_lea.vmem %s11, %s1271
      $region76: #{downsampling_block.1} parent=71 // pred_fallthru
        _
    $region72: #{downsampling_block.1} parent=5 // pred_fallthru
      _
  $region6: #{downsampling_block.1} parent=0 // loop_footer
    %s21 = sadd.s32 1, %s17
  $region7: #{downsampling_block.1} parent=0 // loop_footer_branch
    %16 = sbr.rel target = $region3
  $region8: #{downsampling_block.1} parent=0 // loop_exit
    _

</llo_original>
